<compile_context>
chip_gen: v5e
topology: v5e:2x2
jax: 0.10.0
libtpu: 0.0.40
codegen_flags: <defaults>
</compile_context>

<pallas_src>
import bisect

import jax
import jax.numpy as jnp
from jax import lax
from jax.experimental import pallas as pl
from jax.experimental.pallas import tpu as pltpu


# ----------------------------------------------------------------------------
# VMEM sizing (generation-aware)
# ----------------------------------------------------------------------------
def _vmem_capacity_bytes():
    """Physical per-TensorCore VMEM; conservative fallback = v7x's 64 MiB."""
    try:
        info = pltpu.get_tpu_info()
        cap = int(getattr(info, "vmem_capacity_bytes", 0) or 0)
        if cap > 0:
            return cap
    except Exception:
        pass
    return 64 * 1024 * 1024


_VMEM_CAP = _vmem_capacity_bytes()
# Per-grid-step working-set budget (double-buffered I/O tiles + in-kernel temps):
#   v5e/v6e (128 MiB physical) -> ~42 MiB, v7x (64 MiB) -> ~21 MiB.
_VMEM_BUDGET = int(min(_VMEM_CAP // 3, 48 * 1024 * 1024))
# Scoped-VMEM limit handed to Mosaic: budget + headroom, well below physical.
_VMEM_LIMIT = int(min(_VMEM_CAP - (8 << 20), _VMEM_BUDGET + (16 << 20)))


def _pick_batch_block(B, io_bytes_per_batch, tmp_bytes_per_batch=0, budget=None):
    """Largest batch block whose per-step VMEM working set fits `budget`.

    Counts double-buffered input/output tiles PLUS in-kernel intermediates.
    Keeps >= 2 grid steps when B >= 2 so the 'parallel' batch axis can be
    sharded across v7x's two TensorCores.  Non-divisor blocks are allowed
    (callers use grid = pl.cdiv(B, bb)).
    """
    if budget is None:
        budget = _VMEM_BUDGET
    per_b = 2 * max(1, int(io_bytes_per_batch)) + max(0, int(tmp_bytes_per_batch))
    bb = max(1, min(B, budget // per_b))
    if B >= 2:
        bb = min(bb, (B + 1) // 2)   # >= 2 grid steps
    return int(bb)


def _grid_params():
    return pltpu.CompilerParams(
        dimension_semantics=("parallel",),
        vmem_limit_bytes=_VMEM_LIMIT,
    )


# ----------------------------------------------------------------------------
# Pallas kernels
# ----------------------------------------------------------------------------
def _normalize_kernel(x_ref, o_ref):
    """L2-normalize tokens along channel (f32 math, bf16 output)."""
    x = x_ref[...].astype(jnp.float32)                                 # [Bb, N, C]
    # Note: eps added to the squared norm (torch clamps the norm itself);
    # identical except for exactly-zero tokens.
    inv = lax.rsqrt(jnp.sum(x * x, axis=-1, keepdims=True) + 1e-12)    # EUP
    o_ref[...] = (x * inv).astype(o_ref.dtype)


def normalize_tokens(tokens, out_dtype=jnp.bfloat16):
    """[B, N, C] -> L2-normalized bf16 tokens (computed once, reused everywhere)."""
    B, N, C = tokens.shape
    io = N * C * (tokens.dtype.itemsize + jnp.dtype(out_dtype).itemsize)
    tmp = N * C * 4 * 2                      # f32 upcast + product
    bb = _pick_batch_block(B, io, tmp)
    return pl.pallas_call(
        _normalize_kernel,
        out_shape=jax.ShapeDtypeStruct((B, N, C), out_dtype),
        grid=(pl.cdiv(B, bb),),
        in_specs=[pl.BlockSpec((bb, N, C), lambda i: (i, 0, 0))],
        out_specs=pl.BlockSpec((bb, N, C), lambda i: (i, 0, 0)),
        compiler_params=_grid_params(),
    )(tokens)


def _score_kernel(a_ref, b_ref, max_ref):
    """Row-max cosine score of each a-row against all b-rows.

    Transposed contraction: scores are [Bb, K, M] and the max is taken over
    the sublane (K) axis, so the [Bb, 1, M] result already has M on the lane
    axis -- no relayout before the store.
    """
    scores = jnp.einsum('bkc,bmc->bkm', b_ref[...], a_ref[...],
                        preferred_element_type=jnp.float32)            # MXU bf16, f32 acc
    max_ref[...] = jnp.max(scores, axis=1, keepdims=True)              # [Bb, 1, M]


def cosine_scores(a_norm, b_norm):
    """Per-row max of cosine scores a_norm @ b_norm^T.

    a_norm: [B, M, C] (L2-normalized), b_norm: [B, K, C] (L2-normalized)
    -> node_max [B, M] float32
    """
    B, M, C = a_norm.shape
    K = b_norm.shape[1]
    it = a_norm.dtype.itemsize
    io = (M * C + K * C) * it + M * 4
    tmp = K * M * 4 * 2 + (M + K) * C * it          # f32 scores (+ slack) + operands
    bb = _pick_batch_block(B, io, tmp)
    out = pl.pallas_call(
        _score_kernel,
        out_shape=jax.ShapeDtypeStruct((B, 1, M), jnp.float32),
        grid=(pl.cdiv(B, bb),),
        in_specs=[
            pl.BlockSpec((bb, M, C), lambda i: (i, 0, 0)),
            pl.BlockSpec((bb, K, C), lambda i: (i, 0, 0)),
        ],
        out_specs=pl.BlockSpec((bb, 1, M), lambda i: (i, 0, 0)),
        compiler_params=_grid_params(),
    )(a_norm, b_norm)
    return out[:, 0, :]


def _merge_kernel(s_ref, sn_ref, u_ref, un_ref, o_ref):
    """Fused: cosine scores (bf16 MXU), first-argmax target, one-hot scatter-mean."""
    sn = sn_ref[...]                                           # [Bb, K, C] bf16 norm
    un = un_ref[...]                                           # [Bb, R, C] bf16 norm
    scores = jnp.einsum('brc,bkc->brk', un, sn,
                        preferred_element_type=jnp.float32)    # [Bb, R, K]
    K = scores.shape[-1]
    node_max = jnp.max(scores, axis=-1, keepdims=True)
    col = lax.broadcasted_iota(jnp.int32, scores.shape, 2)
    node_idx = jnp.min(jnp.where(scores == node_max, col, K), axis=-1)   # first argmax
    one_hot = (col == node_idx[:, :, None]).astype(jnp.bfloat16)         # exact 0/1

    # Scatter-add of unselected tokens into their target selected slot.
    # bf16 hi/lo split keeps ~f32 value accuracy while running the MXU at the
    # fast bf16 rate (f32 x f32 matmul is the slow multi-pass path).
    u = u_ref[...].astype(jnp.float32)                          # [Bb, R, C]
    u_hi = u.astype(jnp.bfloat16)
    u_lo = (u - u_hi.astype(jnp.float32)).astype(jnp.bfloat16)
    scat = (jnp.einsum('brk,brc->bkc', one_hot, u_hi,
                       preferred_element_type=jnp.float32)
            + jnp.einsum('brk,brc->bkc', one_hot, u_lo,
                         preferred_element_type=jnp.float32))   # [Bb, K, C]
    sums = s_ref[...].astype(jnp.float32) + scat                # include_self=True
    counts = 1.0 + jnp.sum(one_hot.astype(jnp.float32), axis=1)  # [Bb, K]
    inv = (1.0 / counts)[:, :, None]                            # exact (tiny tile)
    o_ref[...] = (sums * inv).astype(o_ref.dtype)


def merge_tokens(select_token, select_norm, unselect_token, unselect_norm):
    """torch scatter_reduce(dim=1, reduce='mean', include_self=True) equivalent."""
    B, K, C = select_token.shape
    R = unselect_token.shape[1]
    it_raw = select_token.dtype.itemsize
    it_n = select_norm.dtype.itemsize
    io = (K * C + R * C) * (it_raw + it_n) + K * C * it_raw
    tmp = (R * K * (4 + 2 + 4 + 4)          # scores f32, one_hot bf16, iota, where tmp
           + K * C * 8                      # scat + sums f32
           + R * C * (4 + 2 + 2))           # u f32 + hi/lo bf16
    bb = _pick_batch_block(B, io, tmp)
    return pl.pallas_call(
        _merge_kernel,
        out_shape=jax.ShapeDtypeStruct((B, K, C), select_token.dtype),
        grid=(pl.cdiv(B, bb),),
        in_specs=[
            pl.BlockSpec((bb, K, C), lambda i: (i, 0, 0)),
            pl.BlockSpec((bb, K, C), lambda i: (i, 0, 0)),
            pl.BlockSpec((bb, R, C), lambda i: (i, 0, 0)),
            pl.BlockSpec((bb, R, C), lambda i: (i, 0, 0)),
        ],
        out_specs=pl.BlockSpec((bb, K, C), lambda i: (i, 0, 0)),
        input_output_aliases={0: 0},
        compiler_params=_grid_params(),
    )(select_token, select_norm, unselect_token, unselect_norm)


# ----------------------------------------------------------------------------
# TokenSelect module (JAX / Pallas version). No learnable parameters.
# ----------------------------------------------------------------------------
class TokenSelect:
    def __init__(self, expansion_step=(0, 100, 200), keep_rate=(0.5, 0.75, 1.0),
                 initialization_keep_rate=0.25, expansion_multiple_stage=2,
                 distance='cosine'):
        self.expansion_stage = 0
        self.sparse_inference = False
        self.expansion_step = list(expansion_step)
        self.total_expansion_stage = len(expansion_step)
        self.initialization_keep_rate = initialization_keep_rate
        self.expansion_keep_rate = []
        for i in range(len(keep_rate)):
            if i == 0:
                self.expansion_keep_rate.append(keep_rate[i] - initialization_keep_rate)
            else:
                self.expansion_keep_rate.append(keep_rate[i] - keep_rate[i - 1])
        self.final_keep_rate = keep_rate[-1]
        self.expansion_multiple_stage = expansion_multiple_stage
        self.distance = distance
        if distance != 'cosine':
            # TODO(synk): manhattan/euclidean distances not implemented in the
            # Pallas score kernel (module default is cosine).
            raise NotImplementedError('only cosine distance is implemented')
        self._jit_cache = {}

    def update_current_stage(self, epoch: int):
        self.expansion_stage = bisect.bisect_right(self.expansion_step, epoch)

    # -- token_initialization (positions only) --------------------------------
    def token_initialization(self):
        n = self.token_num - 1
        x_keep = int(n * self.initialization_keep_rate)
        step = int(1 // self.initialization_keep_rate)
        sel, unsel = [], []
        for i in range(n):
            if i % step == 0 and len(sel) < x_keep:
                sel.append(i)
            else:
                unsel.append(i)
        assert len(sel) + len(unsel) == n, 'Wrong shape!'
        return sel, unsel

    # -- expansion schedule (static, host-side) -------------------------------
    def _expansion_schedule(self):
        sched = []
        for stage in range(1, self.expansion_stage + 1):
            if stage == self.total_expansion_stage:
                expansion_token_num = (
                    int((self.token_num - 1) * self.final_keep_rate)
                    - int((self.token_num - 1)
                          * (self.initialization_keep_rate
                             + sum(self.expansion_keep_rate[i] for i in range(stage - 1)))))
            else:
                expansion_token_num = int(
                    (self.token_num - 1) * self.expansion_keep_rate[stage - 1])
            for k in range(1, self.expansion_multiple_stage + 1):
                if k == self.expansion_multiple_stage:
                    m = expansion_token_num - (self.expansion_multiple_stage - 1) * (
                        expansion_token_num // self.expansion_multiple_stage)
                else:
                    m = expansion_token_num // self.expansion_multiple_stage
                sched.append(m)
        return sched

    # -- token_expansion (index-only bookkeeping, incremental node_max) -------
    def token_expansion(self, tokens_norm, node_max, sel_pos, unsel_pos):
        B, n, C = tokens_norm.shape
        sched = self._expansion_schedule()
        last_effective = -1
        for idx, m in enumerate(sched):
            if m > 0:
                last_effective = idx

        for idx, m in enumerate(sched):
            R = unsel_pos.shape[1]
            if m <= 0 or R == 0:
                continue
            m = min(m, R)
            # One ascending sort partitions BOTH node_max and the positions
            # consistently (two independent top_k calls can mis-partition on
            # ties).  Promote the m least-similar tokens, in ascending order.
            node_max_sorted, pos_sorted = lax.sort_key_val(node_max, unsel_pos,
                                                           dimension=-1)
            add_pos = pos_sorted[:, :m]
            unsel_pos = pos_sorted[:, m:]
            node_max = node_max_sorted[:, m:]
            sel_pos = jnp.concatenate([sel_pos, add_pos], axis=1)
            assert sel_pos.shape[1] + unsel_pos.shape[1] == self.token_num - 1, 'Wrong shape!'

            if idx == last_effective or unsel_pos.shape[1] == 0:
                continue  # node_max not needed after the last effective sub-step

            # Incremental max update: score ALL tokens against only the m
            # newly-added tokens, gather the still-unselected rows, fold into
            # the carried node_max (max over union == max of maxes).
            add3 = jnp.broadcast_to(add_pos[:, :, None], (B, m, C))
            add_norm = jnp.take_along_axis(tokens_norm, add3, axis=1)
            part = cosine_scores(tokens_norm, add_norm)            # [B, n]
            node_max = jnp.maximum(
                node_max, jnp.take_along_axis(part, unsel_pos, axis=1))
        return sel_pos, unsel_pos

    # -- token_merge -----------------------------------------------------------
    def token_merge(self, select_token, select_index, select_norm,
                    unselect_token, unselect_norm, mode='mean'):
        # TODO(synk): only mode='mean' with include_self=True (torch default) supported.
        assert mode == 'mean'
        select_token = merge_tokens(select_token, select_norm,
                                    unselect_token, unselect_norm)
        return select_token, select_index

    # -- sparse path (jitted) --------------------------------------------------
    def _sparse_token_select(self, x):
        token_cls = x[:, :1, :]
        tokens = x[:, 1:, :]                      # [B, n, C]
        B, n, C = tokens.shape

        # Normalize all patch tokens exactly once (tokens never change before merge).
        tokens_norm = normalize_tokens(tokens)

        sel_list, unsel_list = self.token_initialization()
        sel_arr = jnp.asarray(sel_list, jnp.int32)
        sel_pos = jnp.broadcast_to(sel_arr[None, :], (B, len(sel_list)))
        unsel_pos = jnp.broadcast_to(jnp.asarray(unsel_list, jnp.int32)[None, :],
                                     (B, len(unsel_list)))

        # Initial node_max: best cosine similarity of every token to the seed
        # select set; computed on ALL tokens once, then the unselected rows
        # are gathered (avoids materializing a gathered unselect-norm array).
        sel_norm0 = tokens_norm[:, sel_arr, :]
        node_max = jnp.take_along_axis(cosine_scores(tokens_norm, sel_norm0),
                                       unsel_pos, axis=1)

        sel_pos, unsel_pos = self.token_expansion(tokens_norm, node_max,
                                                  sel_pos, unsel_pos)

        # Gather raw + normalized tokens ONCE, right before merge / output.
        K = sel_pos.shape[1]
        sel3 = jnp.broadcast_to(sel_pos[:, :, None], (B, K, C))
        select_token = jnp.take_along_axis(tokens, sel3, axis=1)

        R = unsel_pos.shape[1]
        if R > 0:
            select_norm = jnp.take_along_axis(tokens_norm, sel3, axis=1)
            un3 = jnp.broadcast_to(unsel_pos[:, :, None], (B, R, C))
            unselect_token = jnp.take_along_axis(tokens, un3, axis=1)
            unselect_norm = jnp.take_along_axis(tokens_norm, un3, axis=1)
            select_token, sel_pos = self.token_merge(
                select_token, sel_pos, select_norm, unselect_token,
                unselect_norm, 'mean')

        x_out = jnp.concatenate([token_cls, select_token], axis=1)
        si = sel_pos + 1
        cls_index = jnp.zeros((B, 1), dtype=si.dtype)
        select_index = jnp.concatenate([cls_index, si], axis=1)
        # TODO(synk): torch returns int64 (.long()); int32 is used here.
        select_index = jnp.broadcast_to(
            select_index[:, :, None], x_out.shape).astype(jnp.int32)
        assert x_out.shape[1] == select_index.shape[1], 'Wrong shape!'
        return x_out, select_index

    # -- token_select / forward -------------------------------------------------
    def token_select(self, x):
        self.token_num = x.shape[1]
        select_index = None
        if (self.expansion_stage > 0
                and not (self.expansion_stage == self.total_expansion_stage
                         and self.final_keep_rate == 1.0)
                and self.sparse_inference):
            key = (tuple(x.shape), str(x.dtype), self.expansion_stage)
            fn = self._jit_cache.get(key)
            if fn is None:
                fn = jax.jit(self._sparse_token_select)
                self._jit_cache[key] = fn
            x, select_index = fn(x)
        return x, select_index

    def forward(self, x):
        return self.token_select(x)

    __call__ = forward


# ----------------------------------------------------------------------------
if __name__ == "__main__":
    key = jax.random.PRNGKey(0)
    B, N, C = 2, 17, 32          # 1 CLS token + 16 patch tokens, hidden=32
    x = jax.random.normal(key, (B, N, C), dtype=jnp.float32)

    # Default-constructed module: expansion_stage=0, sparse_inference=False
    # -> forward is identity, select_index is None (exact PyTorch semantics).
    dense = TokenSelect()
    y_dense, idx_dense = dense(x)
    jax.block_until_ready(y_dense)
    assert idx_dense is None and y_dense.shape == x.shape

    # Sparse-inference path (exercises the Pallas kernels):
    sparse = TokenSelect()
    sparse.sparse_inference = True
    sparse.update_current_stage(150)   # -> expansion_stage = 2
    y_sparse, idx_sparse = sparse(x)
    y_sparse = jax.block_until_ready(y_sparse)
    idx_sparse = jax.block_until_ready(idx_sparse)

    # init keeps 4 of 16, two expansion stages add 4 each -> 12 + CLS = 13
    assert y_sparse.shape == (B, 13, C), y_sparse.shape
    assert idx_sparse.shape == (B, 13, C), idx_sparse.shape
    assert bool(jnp.all(idx_sparse[:, 0, :] == 0))
    # CLS token passes through untouched; selected indices are valid positions.
    assert bool(jnp.allclose(y_sparse[:, 0, :], x[:, 0, :]))
    assert bool(jnp.all((idx_sparse[:, 1:, 0] >= 1) & (idx_sparse[:, 1:, 0] < N)))

    print("KERNEL_OK")
</pallas_src>

<mosaic_0001>
module attributes {stable_mosaic.version = 11 : i64} {
  func.func @_normalize_kernel(%arg0: i32, %arg1: memref<1x16x32xf32, #tpu.memory_space<vmem>>, %arg2: memref<1x16x32xbf16, #tpu.memory_space<vmem>>) attributes {dimension_semantics = [#tpu.dimension_semantics<parallel>], iteration_bounds = array<i64: 2>, scalar_prefetch = 0 : i64, scratch_operands = 0 : i64, tpu.core_type = #tpu.core_type<tc>, window_params = [{transform_indices = @transform_0, window_bounds = array<i64: 1, 16, 32>}, {transform_indices = @transform_1, window_bounds = array<i64: 1, 16, 32>}]} {
    %c0 = arith.constant 0 : index
    %c0_0 = arith.constant 0 : index
    %c0_1 = arith.constant 0 : index
    %0 = vector.load %arg1[%c0, %c0_0, %c0_1] : memref<1x16x32xf32, #tpu.memory_space<vmem>>, vector<1x16x32xf32>
    %1 = arith.mulf %0, %0 : vector<1x16x32xf32>
    %cst = arith.constant dense<0.000000e+00> : vector<1x16xf32>
    %2 = vector.multi_reduction <add>, %1, %cst [2] : vector<1x16x32xf32> to vector<1x16xf32>
    %3 = vector.shape_cast %2 : vector<1x16xf32> to vector<1x16x1xf32>
    %cst_2 = arith.constant 9.99999996E-13 : f32
    %4 = vector.broadcast %cst_2 : f32 to vector<1x16x1xf32>
    %5 = arith.addf %3, %4 : vector<1x16x1xf32>
    %6 = math.rsqrt %5 : vector<1x16x1xf32>
    %7 = vector.broadcast %6 : vector<1x16x1xf32> to vector<1x16x32xf32>
    %8 = arith.mulf %0, %7 : vector<1x16x32xf32>
    %9 = arith.truncf %8 : vector<1x16x32xf32> to vector<1x16x32xbf16>
    %c0_3 = arith.constant 0 : index
    %c0_4 = arith.constant 0 : index
    %c0_5 = arith.constant 0 : index
    %10 = vector.load %arg2[%c0_3, %c0_4, %c0_5] : memref<1x16x32xbf16, #tpu.memory_space<vmem>>, vector<1x16x32xbf16>
    tpu.vector_store %arg2[%c0_3, %c0_4, %c0_5], %9 {strides = array<i32>} : memref<1x16x32xbf16, #tpu.memory_space<vmem>>, vector<1x16x32xbf16>,
    return
  }
  func.func @transform_0(%arg0: i32) -> (i32, i32, i32) {
    %c0_i32 = arith.constant 0 : i32
    %c0_i32_0 = arith.constant 0 : i32
    %c0_i32_1 = arith.constant 0 : i32
    return %arg0, %c0_i32, %c0_i32_0 : i32, i32, i32
  }
  func.func @transform_1(%arg0: i32) -> (i32, i32, i32) {
    %c0_i32 = arith.constant 0 : i32
    %c0_i32_0 = arith.constant 0 : i32
    %c0_i32_1 = arith.constant 0 : i32
    return %arg0, %c0_i32, %c0_i32_0 : i32, i32, i32
  }
}

module attributes {stable_mosaic.version = 11 : i64} {
  func.func @_score_kernel(%arg0: i32, %arg1: memref<1x16x32xbf16, #tpu.memory_space<vmem>>, %arg2: memref<1x4x32xbf16, #tpu.memory_space<vmem>>, %arg3: memref<1x1x16xf32, #tpu.memory_space<vmem>>) attributes {dimension_semantics = [#tpu.dimension_semantics<parallel>], iteration_bounds = array<i64: 2>, scalar_prefetch = 0 : i64, scratch_operands = 0 : i64, tpu.core_type = #tpu.core_type<tc>, window_params = [{transform_indices = @transform_0, window_bounds = array<i64: 1, 16, 32>}, {transform_indices = @transform_1, window_bounds = array<i64: 1, 4, 32>}, {transform_indices = @transform_2, window_bounds = array<i64: 1, 1, 16>}]} {
    %c0 = arith.constant 0 : index
    %c0_0 = arith.constant 0 : index
    %c0_1 = arith.constant 0 : index
    %0 = vector.load %arg2[%c0, %c0_0, %c0_1] : memref<1x4x32xbf16, #tpu.memory_space<vmem>>, vector<1x4x32xbf16>
    %c0_2 = arith.constant 0 : index
    %c0_3 = arith.constant 0 : index
    %c0_4 = arith.constant 0 : index
    %1 = vector.load %arg1[%c0_2, %c0_3, %c0_4] : memref<1x16x32xbf16, #tpu.memory_space<vmem>>, vector<1x16x32xbf16>
    "tpu.trace_start"() <{level = 10 : i32, message = "bkc,bmc->bkm"}> : () -> ()
    %cst = arith.constant dense<0.000000e+00> : vector<1x4x16xf32>
    %2 = tpu.matmul %0, %1, %cst {dimension_numbers = #tpu.dot_dimension_numbers<[2], [2], [1], [1], [0, 0, 0, 1, 1, 1], [0], [0]>} : vector<1x4x32xbf16>, vector<1x16x32xbf16>, vector<1x4x16xf32> -> vector<1x4x16xf32>
    "tpu.trace_stop"() : () -> ()
    %cst_5 = arith.constant dense<0xFF800000> : vector<1x16xf32>
    %3 = vector.multi_reduction <maximumf>, %2, %cst_5 [1] : vector<1x4x16xf32> to vector<1x16xf32>
    %4 = vector.shape_cast %3 : vector<1x16xf32> to vector<1x1x16xf32>
    %c0_6 = arith.constant 0 : index
    %c0_7 = arith.constant 0 : index
    %c0_8 = arith.constant 0 : index
    %5 = vector.load %arg3[%c0_6, %c0_7, %c0_8] : memref<1x1x16xf32, #tpu.memory_space<vmem>>, vector<1x1x16xf32>
    tpu.vector_store %arg3[%c0_6, %c0_7, %c0_8], %4 {strides = array<i32>} : memref<1x1x16xf32, #tpu.memory_space<vmem>>, vector<1x1x16xf32>,
    return
  }
  func.func @transform_0(%arg0: i32) -> (i32, i32, i32) {
    %c0_i32 = arith.constant 0 : i32
    %c0_i32_0 = arith.constant 0 : i32
    %c0_i32_1 = arith.constant 0 : i32
    return %arg0, %c0_i32, %c0_i32_0 : i32, i32, i32
  }
  func.func @transform_1(%arg0: i32) -> (i32, i32, i32) {
    %c0_i32 = arith.constant 0 : i32
    %c0_i32_0 = arith.constant 0 : i32
    %c0_i32_1 = arith.constant 0 : i32
    return %arg0, %c0_i32, %c0_i32_0 : i32, i32, i32
  }
  func.func @transform_2(%arg0: i32) -> (i32, i32, i32) {
    %c0_i32 = arith.constant 0 : i32
    %c0_i32_0 = arith.constant 0 : i32
    %c0_i32_1 = arith.constant 0 : i32
    return %arg0, %c0_i32, %c0_i32_0 : i32, i32, i32
  }
}

module attributes {stable_mosaic.version = 11 : i64} {
  func.func @_score_kernel(%arg0: i32, %arg1: memref<1x16x32xbf16, #tpu.memory_space<vmem>>, %arg2: memref<1x2x32xbf16, #tpu.memory_space<vmem>>, %arg3: memref<1x1x16xf32, #tpu.memory_space<vmem>>) attributes {dimension_semantics = [#tpu.dimension_semantics<parallel>], iteration_bounds = array<i64: 2>, scalar_prefetch = 0 : i64, scratch_operands = 0 : i64, tpu.core_type = #tpu.core_type<tc>, window_params = [{transform_indices = @transform_0, window_bounds = array<i64: 1, 16, 32>}, {transform_indices = @transform_1, window_bounds = array<i64: 1, 2, 32>}, {transform_indices = @transform_2, window_bounds = array<i64: 1, 1, 16>}]} {
    %c0 = arith.constant 0 : index
    %c0_0 = arith.constant 0 : index
    %c0_1 = arith.constant 0 : index
    %0 = vector.load %arg2[%c0, %c0_0, %c0_1] : memref<1x2x32xbf16, #tpu.memory_space<vmem>>, vector<1x2x32xbf16>
    %c0_2 = arith.constant 0 : index
    %c0_3 = arith.constant 0 : index
    %c0_4 = arith.constant 0 : index
    %1 = vector.load %arg1[%c0_2, %c0_3, %c0_4] : memref<1x16x32xbf16, #tpu.memory_space<vmem>>, vector<1x16x32xbf16>
    "tpu.trace_start"() <{level = 10 : i32, message = "bkc,bmc->bkm"}> : () -> ()
    %cst = arith.constant dense<0.000000e+00> : vector<1x2x16xf32>
    %2 = tpu.matmul %0, %1, %cst {dimension_numbers = #tpu.dot_dimension_numbers<[2], [2], [1], [1], [0, 0, 0, 1, 1, 1], [0], [0]>} : vector<1x2x32xbf16>, vector<1x16x32xbf16>, vector<1x2x16xf32> -> vector<1x2x16xf32>
    "tpu.trace_stop"() : () -> ()
    %cst_5 = arith.constant dense<0xFF800000> : vector<1x16xf32>
    %3 = vector.multi_reduction <maximumf>, %2, %cst_5 [1] : vector<1x2x16xf32> to vector<1x16xf32>
    %4 = vector.shape_cast %3 : vector<1x16xf32> to vector<1x1x16xf32>
    %c0_6 = arith.constant 0 : index
    %c0_7 = arith.constant 0 : index
    %c0_8 = arith.constant 0 : index
    %5 = vector.load %arg3[%c0_6, %c0_7, %c0_8] : memref<1x1x16xf32, #tpu.memory_space<vmem>>, vector<1x1x16xf32>
    tpu.vector_store %arg3[%c0_6, %c0_7, %c0_8], %4 {strides = array<i32>} : memref<1x1x16xf32, #tpu.memory_space<vmem>>, vector<1x1x16xf32>,
    return
  }
  func.func @transform_0(%arg0: i32) -> (i32, i32, i32) {
    %c0_i32 = arith.constant 0 : i32
    %c0_i32_0 = arith.constant 0 : i32
    %c0_i32_1 = arith.constant 0 : i32
    return %arg0, %c0_i32, %c0_i32_0 : i32, i32, i32
  }
  func.func @transform_1(%arg0: i32) -> (i32, i32, i32) {
    %c0_i32 = arith.constant 0 : i32
    %c0_i32_0 = arith.constant 0 : i32
    %c0_i32_1 = arith.constant 0 : i32
    return %arg0, %c0_i32, %c0_i32_0 : i32, i32, i32
  }
  func.func @transform_2(%arg0: i32) -> (i32, i32, i32) {
    %c0_i32 = arith.constant 0 : i32
    %c0_i32_0 = arith.constant 0 : i32
    %c0_i32_1 = arith.constant 0 : i32
    return %arg0, %c0_i32, %c0_i32_0 : i32, i32, i32
  }
}

module attributes {stable_mosaic.version = 11 : i64} {
  func.func @_merge_kernel(%arg0: i32, %arg1: memref<1x12x32xf32, #tpu.memory_space<vmem>>, %arg2: memref<1x12x32xbf16, #tpu.memory_space<vmem>>, %arg3: memref<1x4x32xf32, #tpu.memory_space<vmem>>, %arg4: memref<1x4x32xbf16, #tpu.memory_space<vmem>>, %arg5: memref<1x12x32xf32, #tpu.memory_space<vmem>>) attributes {dimension_semantics = [#tpu.dimension_semantics<parallel>], iteration_bounds = array<i64: 2>, scalar_prefetch = 0 : i64, scratch_operands = 0 : i64, tpu.core_type = #tpu.core_type<tc>, window_params = [{transform_indices = @transform_0, window_bounds = array<i64: 1, 12, 32>}, {transform_indices = @transform_1, window_bounds = array<i64: 1, 12, 32>}, {transform_indices = @transform_2, window_bounds = array<i64: 1, 4, 32>}, {transform_indices = @transform_3, window_bounds = array<i64: 1, 4, 32>}, {transform_indices = @transform_4, window_bounds = array<i64: 1, 12, 32>}]} {
    %c0 = arith.constant 0 : index
    %c0_0 = arith.constant 0 : index
    %c0_1 = arith.constant 0 : index
    %0 = vector.load %arg2[%c0, %c0_0, %c0_1] : memref<1x12x32xbf16, #tpu.memory_space<vmem>>, vector<1x12x32xbf16>
    %c0_2 = arith.constant 0 : index
    %c0_3 = arith.constant 0 : index
    %c0_4 = arith.constant 0 : index
    %1 = vector.load %arg4[%c0_2, %c0_3, %c0_4] : memref<1x4x32xbf16, #tpu.memory_space<vmem>>, vector<1x4x32xbf16>
    "tpu.trace_start"() <{level = 10 : i32, message = "brc,bkc->brk"}> : () -> ()
    %cst = arith.constant dense<0.000000e+00> : vector<1x4x12xf32>
    %2 = tpu.matmul %1, %0, %cst {dimension_numbers = #tpu.dot_dimension_numbers<[2], [2], [1], [1], [0, 0, 0, 1, 1, 1], [0], [0]>} : vector<1x4x32xbf16>, vector<1x12x32xbf16>, vector<1x4x12xf32> -> vector<1x4x12xf32>
    "tpu.trace_stop"() : () -> ()
    %cst_5 = arith.constant dense<0xFF800000> : vector<1x4xf32>
    %3 = vector.multi_reduction <maximumf>, %2, %cst_5 [2] : vector<1x4x12xf32> to vector<1x4xf32>
    %4 = vector.shape_cast %3 : vector<1x4xf32> to vector<1x4x1xf32>
    %5 = tpu.iota {dimensions = array<i32: 2>} : vector<1x4x12xi32>
    %6 = vector.broadcast %4 : vector<1x4x1xf32> to vector<1x4x12xf32>
    %7 = arith.cmpf oeq, %2, %6 : vector<1x4x12xf32>
    %c12_i32 = arith.constant 12 : i32
    %8 = vector.broadcast %c12_i32 : i32 to vector<1x4x12xi32>
    %9 = arith.select %7, %5, %8 : vector<1x4x12xi1>, vector<1x4x12xi32>
    %cst_6 = arith.constant dense<2147483647> : vector<1x4xi32>
    %10 = vector.multi_reduction <minsi>, %9, %cst_6 [2] : vector<1x4x12xi32> to vector<1x4xi32>
    %11 = vector.shape_cast %10 : vector<1x4xi32> to vector<1x4x1xi32>
    %12 = vector.broadcast %11 : vector<1x4x1xi32> to vector<1x4x12xi32>
    %13 = arith.cmpi eq, %5, %12 : vector<1x4x12xi32>
    %14 = arith.extui %13 : vector<1x4x12xi1> to vector<1x4x12xi32>
    %15 = arith.sitofp %14 : vector<1x4x12xi32> to vector<1x4x12xf32>
    %16 = arith.truncf %15 : vector<1x4x12xf32> to vector<1x4x12xbf16>
    %c0_7 = arith.constant 0 : index
    %c0_8 = arith.constant 0 : index
    %c0_9 = arith.constant 0 : index
    %17 = vector.load %arg3[%c0_7, %c0_8, %c0_9] : memref<1x4x32xf32, #tpu.memory_space<vmem>>, vector<1x4x32xf32>
    %18 = arith.truncf %17 : vector<1x4x32xf32> to vector<1x4x32xbf16>
    %19 = arith.extf %18 : vector<1x4x32xbf16> to vector<1x4x32xf32>
    %20 = arith.subf %17, %19 : vector<1x4x32xf32>
    %21 = arith.truncf %20 : vector<1x4x32xf32> to vector<1x4x32xbf16>
    "tpu.trace_start"() <{level = 10 : i32, message = "brk,brc->bkc"}> : () -> ()
    %cst_10 = arith.constant dense<0.000000e+00> : vector<1x12x32xf32>
    %22 = tpu.matmul %16, %18, %cst_10 {dimension_numbers = #tpu.dot_dimension_numbers<[1], [1], [2], [2], [0, 0, 0, 2, 1, 2], [0], [0]>} : vector<1x4x12xbf16>, vector<1x4x32xbf16>, vector<1x12x32xf32> -> vector<1x12x32xf32>
    %cst_11 = arith.constant dense<0.000000e+00> : vector<1x12x32xf32>
    %23 = tpu.matmul %16, %21, %cst_11 {dimension_numbers = #tpu.dot_dimension_numbers<[1], [1], [2], [2], [0, 0, 0, 2, 1, 2], [0], [0]>} : vector<1x4x12xbf16>, vector<1x4x32xbf16>, vector<1x12x32xf32> -> vector<1x12x32xf32>
    "tpu.trace_stop"() : () -> ()
    %24 = arith.addf %22, %23 : vector<1x12x32xf32>
    %c0_12 = arith.constant 0 : index
    %c0_13 = arith.constant 0 : index
    %c0_14 = arith.constant 0 : index
    %25 = vector.load %arg1[%c0_12, %c0_13, %c0_14] : memref<1x12x32xf32, #tpu.memory_space<vmem>>, vector<1x12x32xf32>
    %26 = arith.addf %25, %24 : vector<1x12x32xf32>
    %27 = arith.extf %16 : vector<1x4x12xbf16> to vector<1x4x12xf32>
    %cst_15 = arith.constant dense<0.000000e+00> : vector<1x12xf32>
    %28 = vector.multi_reduction <add>, %27, %cst_15 [1] : vector<1x4x12xf32> to vector<1x12xf32>
    %cst_16 = arith.constant 1.000000e+00 : f32
    %29 = vector.broadcast %cst_16 : f32 to vector<1x12xf32>
    %30 = arith.addf %29, %28 : vector<1x12xf32>
    %cst_17 = arith.constant 1.000000e+00 : f32
    %31 = vector.broadcast %cst_17 : f32 to vector<1x12xf32>
    %32 = arith.divf %31, %30 : vector<1x12xf32>
    %33 = vector.shape_cast %32 : vector<1x12xf32> to vector<1x12x1xf32>
    %34 = vector.broadcast %33 : vector<1x12x1xf32> to vector<1x12x32xf32>
    %35 = arith.mulf %26, %34 : vector<1x12x32xf32>
    %c0_18 = arith.constant 0 : index
    %c0_19 = arith.constant 0 : index
    %c0_20 = arith.constant 0 : index
    %36 = vector.load %arg5[%c0_18, %c0_19, %c0_20] : memref<1x12x32xf32, #tpu.memory_space<vmem>>, vector<1x12x32xf32>
    tpu.vector_store %arg5[%c0_18, %c0_19, %c0_20], %35 {strides = array<i32>} : memref<1x12x32xf32, #tpu.memory_space<vmem>>, vector<1x12x32xf32>,
    return
  }
  func.func @transform_0(%arg0: i32) -> (i32, i32, i32) {
    %c0_i32 = arith.constant 0 : i32
    %c0_i32_0 = arith.constant 0 : i32
    %c0_i32_1 = arith.constant 0 : i32
    return %arg0, %c0_i32, %c0_i32_0 : i32, i32, i32
  }
  func.func @transform_1(%arg0: i32) -> (i32, i32, i32) {
    %c0_i32 = arith.constant 0 : i32
    %c0_i32_0 = arith.constant 0 : i32
    %c0_i32_1 = arith.constant 0 : i32
    return %arg0, %c0_i32, %c0_i32_0 : i32, i32, i32
  }
  func.func @transform_2(%arg0: i32) -> (i32, i32, i32) {
    %c0_i32 = arith.constant 0 : i32
    %c0_i32_0 = arith.constant 0 : i32
    %c0_i32_1 = arith.constant 0 : i32
    return %arg0, %c0_i32, %c0_i32_0 : i32, i32, i32
  }
  func.func @transform_3(%arg0: i32) -> (i32, i32, i32) {
    %c0_i32 = arith.constant 0 : i32
    %c0_i32_0 = arith.constant 0 : i32
    %c0_i32_1 = arith.constant 0 : i32
    return %arg0, %c0_i32, %c0_i32_0 : i32, i32, i32
  }
  func.func @transform_4(%arg0: i32) -> (i32, i32, i32) {
    %c0_i32 = arith.constant 0 : i32
    %c0_i32_0 = arith.constant 0 : i32
    %c0_i32_1 = arith.constant 0 : i32
    return %arg0, %c0_i32, %c0_i32_0 : i32, i32, i32
  }
}

</mosaic_0001>

<llo_original>
// kernel: _sparse_token_select.6
$region0: #{_sparse_token_select.6}
  #allocation0 [shape = 'u32[]', space=smem, size = 0x4, offset = 0x4, fixed_abs, tag = 'smem constant byte address 0x4 - core index']
  #allocation1 [shape = 'u32[72,128]{1,0:T(1,128)}', space=vmem, size = 0x9000, scoped, tag = 'internal scratch']
  %s0 = inlined_call_operand.vmem [shape: f32[2,16,32], index: 0, kind: input, shape index: {}]
  %s1 = inlined_call_operand.vmem [shape: bf16[2,16,32], index: 1, kind: output, shape index: {}]
  %s2 = sld [smem:[#allocation0]]
  $region37: #{_sparse_token_select.6} parent=0
    _
  %s4 = ssub.s32 1, %s2
  %s5 = scalar_select 0, %s4, %s2
  loop: start=0, step=1, limit=4
  $region2: #{_sparse_token_select.6} parent=0 // loop_pre_header
    _
  $region3: #{_sparse_token_select.6} parent=0 // loop_header
    %s7 = sphi 0, %s11
    %p8 = scmp.ge.s32.totalorder %s7, 4
    %s17 = sphi 0, %s19
    %s20 = sphi 0, %s17
    %s21 = sphi 0, %s20
    %s37 = sphi 0, %s21
    %s43 = sphi 0, %s45
    %s46 = sphi 0, %s43
    %s47 = sphi 0, %s46
    %s63 = sphi 0, %s47
  $region4: #{_sparse_token_select.6} parent=0 // loop_header_branch
    %10 = sbr.rel (%p8) target = $region8
  $region5: #{_sparse_token_select.6} parent=0 // loop_body
    %s12 = ssub.s32 %s7, 1
    %s13 = ssub.s32 %s7, 2
    %s14 = sadd.s32 %s7, 1
    %s15 = ssub.s32 %s7, %s14
    %p16 = scmp.eq.s32.totalorder %s15, 0
    %s18 = sadd.s32 %s17, 1
    %s19 = scalar_select %p16, %s17, %s18
    %p22 = pneg %p16
    %p23 = scmp.eq.s32.totalorder %s7, 1
    %p24 = por %p22, %p23
    %p25 = scmp.ne.s32.totalorder %s17, %s20
    %p26 = scmp.eq.s32.totalorder %s7, 0
    %p27 = por %p25, %p26
    %p28 = scmp.ne.s32.totalorder %s17, %s20
    %p29 = scmp.eq.s32.totalorder %s12, 1
    %p30 = por %p28, %p29
    %p31 = scmp.ne.s32.totalorder %s20, %s21
    %p32 = scmp.eq.s32.totalorder %s12, 0
    %p33 = por %p31, %p32
    %p34 = scmp.ne.s32.totalorder %s20, %s21
    %p35 = scmp.eq.s32.totalorder %s13, 1
    %p36 = por %p34, %p35
    %p38 = scmp.ne.s32.totalorder %s21, %s37
    %p39 = scmp.eq.s32.totalorder %s13, 0
    %p40 = por %p38, %p39
    %s41 = ssub.s32 %s7, %s14
    %p42 = scmp.eq.s32.totalorder %s41, 0
    %s44 = sadd.s32 %s43, 1
    %s45 = scalar_select %p42, %s43, %s44
    %p48 = pneg %p42
    %p49 = scmp.eq.s32.totalorder %s7, 1
    %p50 = por %p48, %p49
    %p51 = scmp.ne.s32.totalorder %s43, %s46
    %p52 = scmp.eq.s32.totalorder %s7, 0
    %p53 = por %p51, %p52
    %p54 = scmp.ne.s32.totalorder %s43, %s46
    %p55 = scmp.eq.s32.totalorder %s12, 1
    %p56 = por %p54, %p55
    %p57 = scmp.ne.s32.totalorder %s46, %s47
    %p58 = scmp.eq.s32.totalorder %s12, 0
    %p59 = por %p57, %p58
    %p60 = scmp.ne.s32.totalorder %s46, %s47
    %p61 = scmp.eq.s32.totalorder %s13, 1
    %p62 = por %p60, %p61
    %p64 = scmp.ne.s32.totalorder %s47, %s63
    %p65 = scmp.eq.s32.totalorder %s13, 0
    %p66 = por %p64, %p65
    %p67 = scmp.le.s32.totalorder 1, %s7
    %p68 = scmp.lt.s32.totalorder %s7, 3
    %p69 = pnand %p67, %p68
    %p70 = pneg %p69
    // Predicated region
    $region9: #{_sparse_token_select.6} parent=5 // pred_check
      _
    $region10: #{_sparse_token_select.6} parent=5 // pred_check_branch
      %72 = sbr.rel (%p69) target = $region12
    $region11: #{_sparse_token_select.6} parent=5 // pred_region
      %s73 = ssub.s32 %s7, 1
    $region12: #{_sparse_token_select.6} parent=5 // pred_fallthru
      _
    %p74 = scmp.lt.s32.totalorder %s7, 2
    // Predicated region
    $region13: #{_sparse_token_select.6} parent=5 // pred_check
      %p75 = pneg %p74
    $region14: #{_sparse_token_select.6} parent=5 // pred_check_branch
      %77 = sbr.rel (%p75) target = $region16
    $region15: #{_sparse_token_select.6} parent=5 // pred_region
      // Predicated region
      $region17: #{_sparse_token_select.6} parent=15 // pred_check
        %p78 = pneg %p27
      $region18: #{_sparse_token_select.6} parent=15 // pred_check_branch
        %80 = sbr.rel (%p78) target = $region20
      $region19: #{_sparse_token_select.6} parent=15 // pred_region
        %p81 = scmp.lt.s32.totalorder %s7, 1
        %s82 = scalar_select %p81, %s7, 1
        %s83 = smul.addr %s82, 2
        %s84 = smul.addr %s83, 8
        %s85 = scalar_lea.vmem %s0, %s84
      $region20: #{_sparse_token_select.6} parent=15 // pred_fallthru
        _
    $region16: #{_sparse_token_select.6} parent=5 // pred_fallthru
      _
    %p86 = scmp.le.s32.totalorder 1, %s7
    %p87 = scmp.lt.s32.totalorder %s7, 3
    %p88 = pnand %p86, %p87
    %p89 = pneg %p88
    // Predicated region
    $region21: #{_sparse_token_select.6} parent=5 // pred_check
      _
    $region22: #{_sparse_token_select.6} parent=5 // pred_check_branch
      %91 = sbr.rel (%p88) target = $region24
    $region23: #{_sparse_token_select.6} parent=5 // pred_region
      %s92 = ssub.s32 %s7, 1
      %p93 = scmp.lt.s32.totalorder %s12, 1
      %s94 = scalar_select %p93, %s12, 1
      %s95 = smul.addr %s94, 2
      %s96 = smul.addr %s95, 8
      %s97 = scalar_lea.vmem %s0, %s96
      %p98 = pneg %p33
      %p99 = pneg %p30
      %p100 = pneg %p59
      %p101 = pneg %p56
      %p102 = scmp.lt.s32.totalorder %s12, 1
      %s103 = scalar_select %p102, %s12, 1
      %s104 = smul.addr %s103, 2
      %s105 = smul.addr %s104, 4
      %s106 = scalar_lea.vmem %s1, %s105
      %p107 = scmp.lt.s32.totalorder %s12, 1
      %s108 = scalar_select %p107, %s12, 1
      %s109 = smul.addr %s108, 2
      %s110 = smul.addr %s109, 8
      %s111 = scalar_lea.vmem %s0, %s110
      %p112 = scmp.lt.s32.totalorder %s12, 1
      %s113 = scalar_select %p112, %s12, 1
      %s114 = smul.addr %s113, 2
      %s115 = smul.addr %s114, 4
      %s116 = scalar_lea.vmem %s1, %s115
      %v117 = vld [vmem:[%s111] sm:$0xff]
      %v118 = vld [vmem:[%s111 + $0x8] sm:$0xff]
      %v119 = vmul.f32 %v117, %v117
      %v120 = vmul.f32 %v118, %v118
      %vm121 = vcmask 261120
      %v122 = vsel %vm121, %v119, 0.0
      %123 = vadd.xlane.f32.xlu0 %v122
      %v124 = vpop.xlane.xlu0 %123
      %v125 = vsel %vm121, %v120, 0.0
      %126 = vadd.xlane.f32.xlu0 %v125
      %v127 = vpop.xlane.xlu0 %126
      %v128 = vadd.f32 %v124, 1e-12
      %v129 = vadd.f32 %v127, 1e-12
      %v130 = vrsqrt.pop %v128
      %v131 = vmul.f32 %v130, %v128
      %v132 = vmul.f32 %v131, %v130
      %v133 = vmul.f32 0.5, %v132
      %v134 = vsub.f32 1.5, %v133
      %v135 = vmul.f32 %v130, %v134
      %vm136 = vweird.f32 %v128
      %vm137 = vweird.f32 %v130
      %vm138 = vmor %vm136, %vm137
      %v139 = vsel %vm138, %v130, %v135
      %v140 = vrsqrt.pop %v129
      %v141 = vmul.f32 %v140, %v129
      %v142 = vmul.f32 %v141, %v140
      %v143 = vmul.f32 0.5, %v142
      %v144 = vsub.f32 1.5, %v143
      %v145 = vmul.f32 %v140, %v144
      %vm146 = vweird.f32 %v129
      %vm147 = vweird.f32 %v140
      %vm148 = vmor %vm146, %vm147
      %v149 = vsel %vm148, %v140, %v145
      %v150 = vmul.f32 %v117, %v139
      %v151 = vmul.f32 %v118, %v149
      %v152 = vpack.c.bf16 %v150, %v150
      %v153 = vpack.c.bf16 %v151, %v151
      %vm154 = vcmask 257024
      %155 = vst.msk [vmem:[%s116] sm:$0xf] %vm154, %v152
      %156 = vst.msk [vmem:[%s116 + $0x4] sm:$0xf] %vm154, %v153
      %p157 = scmp.lt.s32.totalorder %s12, 1
      %s158 = scalar_select %p157, %s12, 1
      %s159 = smul.addr %s158, 2
      %s160 = smul.addr %s159, 4
      %s161 = scalar_lea.vmem %s1, %s160
      // Predicated region
      $region25: #{_sparse_token_select.6} parent=23 // pred_check
        %p162 = pneg %p56
      $region26: #{_sparse_token_select.6} parent=23 // pred_check_branch
        %164 = sbr.rel (%p162) target = $region28
      $region27: #{_sparse_token_select.6} parent=23 // pred_region
        _
      $region28: #{_sparse_token_select.6} parent=23 // pred_fallthru
        _
    $region24: #{_sparse_token_select.6} parent=5 // pred_fallthru
      _
    %p165 = scmp.le.s32.totalorder 2, %s7
    // Predicated region
    $region29: #{_sparse_token_select.6} parent=5 // pred_check
      %p166 = pneg %p165
    $region30: #{_sparse_token_select.6} parent=5 // pred_check_branch
      %168 = sbr.rel (%p166) target = $region32
    $region31: #{_sparse_token_select.6} parent=5 // pred_region
      %s169 = ssub.s32 %s7, 2
      // Predicated region
      $region33: #{_sparse_token_select.6} parent=31 // pred_check
        %p170 = pneg %p62
      $region34: #{_sparse_token_select.6} parent=31 // pred_check_branch
        %172 = sbr.rel (%p170) target = $region36
      $region35: #{_sparse_token_select.6} parent=31 // pred_region
        %p173 = scmp.lt.s32.totalorder %s13, 1
        %s174 = scalar_select %p173, %s13, 1
        %s175 = smul.addr %s174, 2
        %s176 = smul.addr %s175, 4
        %s177 = scalar_lea.vmem %s1, %s176
      $region36: #{_sparse_token_select.6} parent=31 // pred_fallthru
        _
    $region32: #{_sparse_token_select.6} parent=5 // pred_fallthru
      _
  $region6: #{_sparse_token_select.6} parent=0 // loop_footer
    %s11 = sadd.s32 1, %s7
  $region7: #{_sparse_token_select.6} parent=0 // loop_footer_branch
    %6 = sbr.rel target = $region3
  $region8: #{_sparse_token_select.6} parent=0 // loop_exit
    _

// kernel: _sparse_token_select.7
$region0: #{_sparse_token_select.7}
  #allocation0 [shape = 'u32[]', space=smem, size = 0x4, offset = 0x4, fixed_abs, tag = 'smem constant byte address 0x4 - core index']
  #allocation1 [shape = 'u32[72,128]{1,0:T(1,128)}', space=vmem, size = 0x9000, scoped, tag = 'internal scratch']
  %s0 = inlined_call_operand.vmem [shape: bf16[2,16,32], index: 0, kind: input, shape index: {}]
  %s1 = inlined_call_operand.vmem [shape: bf16[2,4,32], index: 1, kind: input, shape index: {}]
  %s2 = inlined_call_operand.vmem [shape: f32[2,1,16], index: 2, kind: output, shape index: {}]
  %s3 = sld [smem:[#allocation0]]
  $region41: #{_sparse_token_select.7} parent=0
    _
  %s5 = ssub.s32 1, %s3
  %s6 = scalar_select 0, %s5, %s3
  loop: start=0, step=1, limit=4
  $region2: #{_sparse_token_select.7} parent=0 // loop_pre_header
    _
  $region3: #{_sparse_token_select.7} parent=0 // loop_header
    %s8 = sphi 0, %s12
    %p9 = scmp.ge.s32.totalorder %s8, 4
    %s18 = sphi 0, %s20
    %s21 = sphi 0, %s18
    %s22 = sphi 0, %s21
    %s38 = sphi 0, %s22
    %s44 = sphi 0, %s46
    %s47 = sphi 0, %s44
    %s48 = sphi 0, %s47
    %s64 = sphi 0, %s48
    %s70 = sphi 0, %s72
    %s73 = sphi 0, %s70
    %s74 = sphi 0, %s73
    %s90 = sphi 0, %s74
  $region4: #{_sparse_token_select.7} parent=0 // loop_header_branch
    %11 = sbr.rel (%p9) target = $region8
  $region5: #{_sparse_token_select.7} parent=0 // loop_body
    %s13 = ssub.s32 %s8, 1
    %s14 = ssub.s32 %s8, 2
    %s15 = sadd.s32 %s8, 1
    %s16 = ssub.s32 %s8, %s15
    %p17 = scmp.eq.s32.totalorder %s16, 0
    %s19 = sadd.s32 %s18, 1
    %s20 = scalar_select %p17, %s18, %s19
    %p23 = pneg %p17
    %p24 = scmp.eq.s32.totalorder %s8, 1
    %p25 = por %p23, %p24
    %p26 = scmp.ne.s32.totalorder %s18, %s21
    %p27 = scmp.eq.s32.totalorder %s8, 0
    %p28 = por %p26, %p27
    %p29 = scmp.ne.s32.totalorder %s18, %s21
    %p30 = scmp.eq.s32.totalorder %s13, 1
    %p31 = por %p29, %p30
    %p32 = scmp.ne.s32.totalorder %s21, %s22
    %p33 = scmp.eq.s32.totalorder %s13, 0
    %p34 = por %p32, %p33
    %p35 = scmp.ne.s32.totalorder %s21, %s22
    %p36 = scmp.eq.s32.totalorder %s14, 1
    %p37 = por %p35, %p36
    %p39 = scmp.ne.s32.totalorder %s22, %s38
    %p40 = scmp.eq.s32.totalorder %s14, 0
    %p41 = por %p39, %p40
    %s42 = ssub.s32 %s8, %s15
    %p43 = scmp.eq.s32.totalorder %s42, 0
    %s45 = sadd.s32 %s44, 1
    %s46 = scalar_select %p43, %s44, %s45
    %p49 = pneg %p43
    %p50 = scmp.eq.s32.totalorder %s8, 1
    %p51 = por %p49, %p50
    %p52 = scmp.ne.s32.totalorder %s44, %s47
    %p53 = scmp.eq.s32.totalorder %s8, 0
    %p54 = por %p52, %p53
    %p55 = scmp.ne.s32.totalorder %s44, %s47
    %p56 = scmp.eq.s32.totalorder %s13, 1
    %p57 = por %p55, %p56
    %p58 = scmp.ne.s32.totalorder %s47, %s48
    %p59 = scmp.eq.s32.totalorder %s13, 0
    %p60 = por %p58, %p59
    %p61 = scmp.ne.s32.totalorder %s47, %s48
    %p62 = scmp.eq.s32.totalorder %s14, 1
    %p63 = por %p61, %p62
    %p65 = scmp.ne.s32.totalorder %s48, %s64
    %p66 = scmp.eq.s32.totalorder %s14, 0
    %p67 = por %p65, %p66
    %s68 = ssub.s32 %s8, %s15
    %p69 = scmp.eq.s32.totalorder %s68, 0
    %s71 = sadd.s32 %s70, 1
    %s72 = scalar_select %p69, %s70, %s71
    %p75 = pneg %p69
    %p76 = scmp.eq.s32.totalorder %s8, 1
    %p77 = por %p75, %p76
    %p78 = scmp.ne.s32.totalorder %s70, %s73
    %p79 = scmp.eq.s32.totalorder %s8, 0
    %p80 = por %p78, %p79
    %p81 = scmp.ne.s32.totalorder %s70, %s73
    %p82 = scmp.eq.s32.totalorder %s13, 1
    %p83 = por %p81, %p82
    %p84 = scmp.ne.s32.totalorder %s73, %s74
    %p85 = scmp.eq.s32.totalorder %s13, 0
    %p86 = por %p84, %p85
    %p87 = scmp.ne.s32.totalorder %s73, %s74
    %p88 = scmp.eq.s32.totalorder %s14, 1
    %p89 = por %p87, %p88
    %p91 = scmp.ne.s32.totalorder %s74, %s90
    %p92 = scmp.eq.s32.totalorder %s14, 0
    %p93 = por %p91, %p92
    %p94 = scmp.le.s32.totalorder 1, %s8
    %p95 = scmp.lt.s32.totalorder %s8, 3
    %p96 = pnand %p94, %p95
    %p97 = pneg %p96
    // Predicated region
    $region9: #{_sparse_token_select.7} parent=5 // pred_check
      _
    $region10: #{_sparse_token_select.7} parent=5 // pred_check_branch
      %99 = sbr.rel (%p96) target = $region12
    $region11: #{_sparse_token_select.7} parent=5 // pred_region
      %s100 = ssub.s32 %s8, 1
    $region12: #{_sparse_token_select.7} parent=5 // pred_fallthru
      _
    %p101 = scmp.lt.s32.totalorder %s8, 2
    // Predicated region
    $region13: #{_sparse_token_select.7} parent=5 // pred_check
      %p102 = pneg %p101
    $region14: #{_sparse_token_select.7} parent=5 // pred_check_branch
      %104 = sbr.rel (%p102) target = $region16
    $region15: #{_sparse_token_select.7} parent=5 // pred_region
      // Predicated region
      $region17: #{_sparse_token_select.7} parent=15 // pred_check
        %p105 = pneg %p28
      $region18: #{_sparse_token_select.7} parent=15 // pred_check_branch
        %107 = sbr.rel (%p105) target = $region20
      $region19: #{_sparse_token_select.7} parent=15 // pred_region
        %p108 = scmp.lt.s32.totalorder %s8, 1
        %s109 = scalar_select %p108, %s8, 1
        %s110 = smul.addr %s109, 2
        %s111 = smul.addr %s110, 4
        %s112 = scalar_lea.vmem %s0, %s111
      $region20: #{_sparse_token_select.7} parent=15 // pred_fallthru
        _
      // Predicated region
      $region21: #{_sparse_token_select.7} parent=15 // pred_check
        %p113 = pneg %p54
      $region22: #{_sparse_token_select.7} parent=15 // pred_check_branch
        %115 = sbr.rel (%p113) target = $region24
      $region23: #{_sparse_token_select.7} parent=15 // pred_region
        %p116 = scmp.lt.s32.totalorder %s8, 1
        %s117 = scalar_select %p116, %s8, 1
        %s118 = smul.addr %s117, 2
        %s119 = scalar_lea.vmem %s1, %s118
      $region24: #{_sparse_token_select.7} parent=15 // pred_fallthru
        _
    $region16: #{_sparse_token_select.7} parent=5 // pred_fallthru
      _
    %p120 = scmp.le.s32.totalorder 1, %s8
    %p121 = scmp.lt.s32.totalorder %s8, 3
    %p122 = pnand %p120, %p121
    %p123 = pneg %p122
    // Predicated region
    $region25: #{_sparse_token_select.7} parent=5 // pred_check
      _
    $region26: #{_sparse_token_select.7} parent=5 // pred_check_branch
      %125 = sbr.rel (%p122) target = $region28
    $region27: #{_sparse_token_select.7} parent=5 // pred_region
      %s126 = ssub.s32 %s8, 1
      %p127 = scmp.lt.s32.totalorder %s13, 1
      %s128 = scalar_select %p127, %s13, 1
      %s129 = smul.addr %s128, 2
      %s130 = smul.addr %s129, 4
      %s131 = scalar_lea.vmem %s0, %s130
      %p132 = pneg %p34
      %p133 = pneg %p31
      %p134 = scmp.lt.s32.totalorder %s13, 1
      %s135 = scalar_select %p134, %s13, 1
      %s136 = smul.addr %s135, 2
      %s137 = scalar_lea.vmem %s1, %s136
      %p138 = pneg %p60
      %p139 = pneg %p57
      %p140 = pneg %p86
      %p141 = pneg %p83
      %p142 = scmp.lt.s32.totalorder %s13, 1
      %s143 = scalar_select %p142, %s13, 1
      %s144 = scalar_lea.vmem %s2, %s143
      %p145 = scmp.lt.s32.totalorder %s13, 1
      %s146 = scalar_select %p145, %s13, 1
      %s147 = smul.addr %s146, 2
      %s148 = smul.addr %s147, 4
      %s149 = scalar_lea.vmem %s0, %s148
      %p150 = scmp.lt.s32.totalorder %s13, 1
      %s151 = scalar_select %p150, %s13, 1
      %s152 = smul.addr %s151, 2
      %s153 = scalar_lea.vmem %s1, %s152
      %p154 = scmp.lt.s32.totalorder %s13, 1
      %s155 = scalar_select %p154, %s13, 1
      %s156 = scalar_lea.vmem %s2, %s155
      %v158 = vld [vmem:[%s153] sm:$0x3]
      %v159 = vld [vmem:[%s149] sm:$0xf]
      %v160 = vld [vmem:[%s149 + $0x4] sm:$0xf]
      %v163 = vunpack.c.l.b16 %v159
      %v164 = vunpack.c.l.b16 %v160
      %v165 = vpack.c.b16 %v164, %v163
      %vm166 = vcmask 261120
      %v168 = vsel %vm166, %v158, 0
      %v171 = vsel %vm166, %v165, 0
      %173 = vmatpush.bf16.xpose.msra.mxu0 0
      %174 = vmatpush.bf16.xpose.msra.mxu0 0
      %175 = vmatpush.bf16.xpose.msra.mxu0 0
      %176 = vmatpush.bf16.xpose.msra.mxu0 0
      %177 = vmatpush.bf16.xpose.msra.mxu0 0
      %178 = vmatpush.bf16.xpose.msra.mxu0 0
      %179 = vmatpush.bf16.xpose.msra.mxu0 0
      %180 = vmatpush.bf16.xpose.msra.mxu0 %v171
      %181 = vmatmul.bf16.gmra.mxu0 %v168
      %v182 = vpop.f32.mrf.mxu0
      %v183 = vadd.f32 0.0, %v182
      %v184 = vpop.f32.mrf.mxu0
      %185 = vdwg.mxu0
      %vm186 = vcmask 125952
      %v187 = vsel %vm186, %v183, -inf
      %v188 = vrot.slane %v187, 4
      %v189 = vmax.f32 %v187, %v188
      %v190 = vrot.slane %v189, 2
      %v191 = vmax.f32 %v189, %v190
      %v192 = vrot.slane %v191, 1
      %v193 = vmax.f32 %v191, %v192
      %vm194 = vcmask 122880
      %195 = vst.msk [vmem:[%s156] sm:$0x1] %vm194, %v193
      %p196 = scmp.lt.s32.totalorder %s13, 1
      %s197 = scalar_select %p196, %s13, 1
      %s198 = scalar_lea.vmem %s2, %s197
      // Predicated region
      $region29: #{_sparse_token_select.7} parent=27 // pred_check
        %p199 = pneg %p83
      $region30: #{_sparse_token_select.7} parent=27 // pred_check_branch
        %201 = sbr.rel (%p199) target = $region32
      $region31: #{_sparse_token_select.7} parent=27 // pred_region
        _
      $region32: #{_sparse_token_select.7} parent=27 // pred_fallthru
        _
    $region28: #{_sparse_token_select.7} parent=5 // pred_fallthru
      _
    %p202 = scmp.le.s32.totalorder 2, %s8
    // Predicated region
    $region33: #{_sparse_token_select.7} parent=5 // pred_check
      %p203 = pneg %p202
    $region34: #{_sparse_token_select.7} parent=5 // pred_check_branch
      %205 = sbr.rel (%p203) target = $region36
    $region35: #{_sparse_token_select.7} parent=5 // pred_region
      %s206 = ssub.s32 %s8, 2
      // Predicated region
      $region37: #{_sparse_token_select.7} parent=35 // pred_check
        %p207 = pneg %p89
      $region38: #{_sparse_token_select.7} parent=35 // pred_check_branch
        %209 = sbr.rel (%p207) target = $region40
      $region39: #{_sparse_token_select.7} parent=35 // pred_region
        %p210 = scmp.lt.s32.totalorder %s14, 1
        %s211 = scalar_select %p210, %s14, 1
        %s212 = scalar_lea.vmem %s2, %s211
      $region40: #{_sparse_token_select.7} parent=35 // pred_fallthru
        _
    $region36: #{_sparse_token_select.7} parent=5 // pred_fallthru
      _
  $region6: #{_sparse_token_select.7} parent=0 // loop_footer
    %s12 = sadd.s32 1, %s8
  $region7: #{_sparse_token_select.7} parent=0 // loop_footer_branch
    %7 = sbr.rel target = $region3
  $region8: #{_sparse_token_select.7} parent=0 // loop_exit
    _

// kernel: _sparse_token_select.8
$region0: #{_sparse_token_select.8}
  #allocation0 [shape = 'u32[]', space=smem, size = 0x4, offset = 0x4, fixed_abs, tag = 'smem constant byte address 0x4 - core index']
  #allocation1 [shape = 'u32[72,128]{1,0:T(1,128)}', space=vmem, size = 0x9000, scoped, tag = 'internal scratch']
  %s0 = inlined_call_operand.vmem [shape: bf16[2,16,32], index: 0, kind: input, shape index: {}]
  %s1 = inlined_call_operand.vmem [shape: bf16[2,2,32], index: 1, kind: input, shape index: {}]
  %s2 = inlined_call_operand.vmem [shape: f32[2,1,16], index: 2, kind: output, shape index: {}]
  %s3 = sld [smem:[#allocation0]]
  $region41: #{_sparse_token_select.8} parent=0
    _
  %s5 = ssub.s32 1, %s3
  %s6 = scalar_select 0, %s5, %s3
  loop: start=0, step=1, limit=4
  $region2: #{_sparse_token_select.8} parent=0 // loop_pre_header
    _
  $region3: #{_sparse_token_select.8} parent=0 // loop_header
    %s8 = sphi 0, %s12
    %p9 = scmp.ge.s32.totalorder %s8, 4
    %s18 = sphi 0, %s20
    %s21 = sphi 0, %s18
    %s22 = sphi 0, %s21
    %s38 = sphi 0, %s22
    %s44 = sphi 0, %s46
    %s47 = sphi 0, %s44
    %s48 = sphi 0, %s47
    %s64 = sphi 0, %s48
    %s70 = sphi 0, %s72
    %s73 = sphi 0, %s70
    %s74 = sphi 0, %s73
    %s90 = sphi 0, %s74
  $region4: #{_sparse_token_select.8} parent=0 // loop_header_branch
    %11 = sbr.rel (%p9) target = $region8
  $region5: #{_sparse_token_select.8} parent=0 // loop_body
    %s13 = ssub.s32 %s8, 1
    %s14 = ssub.s32 %s8, 2
    %s15 = sadd.s32 %s8, 1
    %s16 = ssub.s32 %s8, %s15
    %p17 = scmp.eq.s32.totalorder %s16, 0
    %s19 = sadd.s32 %s18, 1
    %s20 = scalar_select %p17, %s18, %s19
    %p23 = pneg %p17
    %p24 = scmp.eq.s32.totalorder %s8, 1
    %p25 = por %p23, %p24
    %p26 = scmp.ne.s32.totalorder %s18, %s21
    %p27 = scmp.eq.s32.totalorder %s8, 0
    %p28 = por %p26, %p27
    %p29 = scmp.ne.s32.totalorder %s18, %s21
    %p30 = scmp.eq.s32.totalorder %s13, 1
    %p31 = por %p29, %p30
    %p32 = scmp.ne.s32.totalorder %s21, %s22
    %p33 = scmp.eq.s32.totalorder %s13, 0
    %p34 = por %p32, %p33
    %p35 = scmp.ne.s32.totalorder %s21, %s22
    %p36 = scmp.eq.s32.totalorder %s14, 1
    %p37 = por %p35, %p36
    %p39 = scmp.ne.s32.totalorder %s22, %s38
    %p40 = scmp.eq.s32.totalorder %s14, 0
    %p41 = por %p39, %p40
    %s42 = ssub.s32 %s8, %s15
    %p43 = scmp.eq.s32.totalorder %s42, 0
    %s45 = sadd.s32 %s44, 1
    %s46 = scalar_select %p43, %s44, %s45
    %p49 = pneg %p43
    %p50 = scmp.eq.s32.totalorder %s8, 1
    %p51 = por %p49, %p50
    %p52 = scmp.ne.s32.totalorder %s44, %s47
    %p53 = scmp.eq.s32.totalorder %s8, 0
    %p54 = por %p52, %p53
    %p55 = scmp.ne.s32.totalorder %s44, %s47
    %p56 = scmp.eq.s32.totalorder %s13, 1
    %p57 = por %p55, %p56
    %p58 = scmp.ne.s32.totalorder %s47, %s48
    %p59 = scmp.eq.s32.totalorder %s13, 0
    %p60 = por %p58, %p59
    %p61 = scmp.ne.s32.totalorder %s47, %s48
    %p62 = scmp.eq.s32.totalorder %s14, 1
    %p63 = por %p61, %p62
    %p65 = scmp.ne.s32.totalorder %s48, %s64
    %p66 = scmp.eq.s32.totalorder %s14, 0
    %p67 = por %p65, %p66
    %s68 = ssub.s32 %s8, %s15
    %p69 = scmp.eq.s32.totalorder %s68, 0
    %s71 = sadd.s32 %s70, 1
    %s72 = scalar_select %p69, %s70, %s71
    %p75 = pneg %p69
    %p76 = scmp.eq.s32.totalorder %s8, 1
    %p77 = por %p75, %p76
    %p78 = scmp.ne.s32.totalorder %s70, %s73
    %p79 = scmp.eq.s32.totalorder %s8, 0
    %p80 = por %p78, %p79
    %p81 = scmp.ne.s32.totalorder %s70, %s73
    %p82 = scmp.eq.s32.totalorder %s13, 1
    %p83 = por %p81, %p82
    %p84 = scmp.ne.s32.totalorder %s73, %s74
    %p85 = scmp.eq.s32.totalorder %s13, 0
    %p86 = por %p84, %p85
    %p87 = scmp.ne.s32.totalorder %s73, %s74
    %p88 = scmp.eq.s32.totalorder %s14, 1
    %p89 = por %p87, %p88
    %p91 = scmp.ne.s32.totalorder %s74, %s90
    %p92 = scmp.eq.s32.totalorder %s14, 0
    %p93 = por %p91, %p92
    %p94 = scmp.le.s32.totalorder 1, %s8
    %p95 = scmp.lt.s32.totalorder %s8, 3
    %p96 = pnand %p94, %p95
    %p97 = pneg %p96
    // Predicated region
    $region9: #{_sparse_token_select.8} parent=5 // pred_check
      _
    $region10: #{_sparse_token_select.8} parent=5 // pred_check_branch
      %99 = sbr.rel (%p96) target = $region12
    $region11: #{_sparse_token_select.8} parent=5 // pred_region
      %s100 = ssub.s32 %s8, 1
    $region12: #{_sparse_token_select.8} parent=5 // pred_fallthru
      _
    %p101 = scmp.lt.s32.totalorder %s8, 2
    // Predicated region
    $region13: #{_sparse_token_select.8} parent=5 // pred_check
      %p102 = pneg %p101
    $region14: #{_sparse_token_select.8} parent=5 // pred_check_branch
      %104 = sbr.rel (%p102) target = $region16
    $region15: #{_sparse_token_select.8} parent=5 // pred_region
      // Predicated region
      $region17: #{_sparse_token_select.8} parent=15 // pred_check
        %p105 = pneg %p28
      $region18: #{_sparse_token_select.8} parent=15 // pred_check_branch
        %107 = sbr.rel (%p105) target = $region20
      $region19: #{_sparse_token_select.8} parent=15 // pred_region
        %p108 = scmp.lt.s32.totalorder %s8, 1
        %s109 = scalar_select %p108, %s8, 1
        %s110 = smul.addr %s109, 2
        %s111 = smul.addr %s110, 4
        %s112 = scalar_lea.vmem %s0, %s111
      $region20: #{_sparse_token_select.8} parent=15 // pred_fallthru
        _
      // Predicated region
      $region21: #{_sparse_token_select.8} parent=15 // pred_check
        %p113 = pneg %p54
      $region22: #{_sparse_token_select.8} parent=15 // pred_check_branch
        %115 = sbr.rel (%p113) target = $region24
      $region23: #{_sparse_token_select.8} parent=15 // pred_region
        %p116 = scmp.lt.s32.totalorder %s8, 1
        %s117 = scalar_select %p116, %s8, 1
        %s118 = scalar_lea.vmem %s1, %s117
      $region24: #{_sparse_token_select.8} parent=15 // pred_fallthru
        _
    $region16: #{_sparse_token_select.8} parent=5 // pred_fallthru
      _
    %p119 = scmp.le.s32.totalorder 1, %s8
    %p120 = scmp.lt.s32.totalorder %s8, 3
    %p121 = pnand %p119, %p120
    %p122 = pneg %p121
    // Predicated region
    $region25: #{_sparse_token_select.8} parent=5 // pred_check
      _
    $region26: #{_sparse_token_select.8} parent=5 // pred_check_branch
      %124 = sbr.rel (%p121) target = $region28
    $region27: #{_sparse_token_select.8} parent=5 // pred_region
      %s125 = ssub.s32 %s8, 1
      %p126 = scmp.lt.s32.totalorder %s13, 1
      %s127 = scalar_select %p126, %s13, 1
      %s128 = smul.addr %s127, 2
      %s129 = smul.addr %s128, 4
      %s130 = scalar_lea.vmem %s0, %s129
      %p131 = pneg %p34
      %p132 = pneg %p31
      %p133 = scmp.lt.s32.totalorder %s13, 1
      %s134 = scalar_select %p133, %s13, 1
      %s135 = scalar_lea.vmem %s1, %s134
      %p136 = pneg %p60
      %p137 = pneg %p57
      %p138 = pneg %p86
      %p139 = pneg %p83
      %p140 = scmp.lt.s32.totalorder %s13, 1
      %s141 = scalar_select %p140, %s13, 1
      %s142 = scalar_lea.vmem %s2, %s141
      %p143 = scmp.lt.s32.totalorder %s13, 1
      %s144 = scalar_select %p143, %s13, 1
      %s145 = smul.addr %s144, 2
      %s146 = smul.addr %s145, 4
      %s147 = scalar_lea.vmem %s0, %s146
      %p148 = scmp.lt.s32.totalorder %s13, 1
      %s149 = scalar_select %p148, %s13, 1
      %s150 = scalar_lea.vmem %s1, %s149
      %p151 = scmp.lt.s32.totalorder %s13, 1
      %s152 = scalar_select %p151, %s13, 1
      %s153 = scalar_lea.vmem %s2, %s152
      %v155 = vld [vmem:[%s150] sm:$0x1]
      %v156 = vld [vmem:[%s147] sm:$0xf]
      %v157 = vld [vmem:[%s147 + $0x4] sm:$0xf]
      %v160 = vunpack.c.l.b16 %v156
      %v161 = vunpack.c.l.b16 %v157
      %v162 = vpack.c.b16 %v161, %v160
      %vm163 = vcmask 261120
      %v165 = vsel %vm163, %v155, 0
      %v168 = vsel %vm163, %v162, 0
      %170 = vmatpush.bf16.xpose.msra.mxu0 0
      %171 = vmatpush.bf16.xpose.msra.mxu0 0
      %172 = vmatpush.bf16.xpose.msra.mxu0 0
      %173 = vmatpush.bf16.xpose.msra.mxu0 0
      %174 = vmatpush.bf16.xpose.msra.mxu0 0
      %175 = vmatpush.bf16.xpose.msra.mxu0 0
      %176 = vmatpush.bf16.xpose.msra.mxu0 0
      %177 = vmatpush.bf16.xpose.msra.mxu0 %v168
      %178 = vmatmul.bf16.gmra.mxu0 %v165
      %v179 = vpop.f32.mrf.mxu0
      %v180 = vadd.f32 0.0, %v179
      %v181 = vpop.f32.mrf.mxu0
      %182 = vdwg.mxu0
      %vm183 = vcmask 123904
      %v184 = vsel %vm183, %v180, -inf
      %v185 = vrot.slane %v184, 4
      %v186 = vmax.f32 %v184, %v185
      %v187 = vrot.slane %v186, 2
      %v188 = vmax.f32 %v186, %v187
      %v189 = vrot.slane %v188, 1
      %v190 = vmax.f32 %v188, %v189
      %vm191 = vcmask 122880
      %192 = vst.msk [vmem:[%s153] sm:$0x1] %vm191, %v190
      %p193 = scmp.lt.s32.totalorder %s13, 1
      %s194 = scalar_select %p193, %s13, 1
      %s195 = scalar_lea.vmem %s2, %s194
      // Predicated region
      $region29: #{_sparse_token_select.8} parent=27 // pred_check
        %p196 = pneg %p83
      $region30: #{_sparse_token_select.8} parent=27 // pred_check_branch
        %198 = sbr.rel (%p196) target = $region32
      $region31: #{_sparse_token_select.8} parent=27 // pred_region
        _
      $region32: #{_sparse_token_select.8} parent=27 // pred_fallthru
        _
    $region28: #{_sparse_token_select.8} parent=5 // pred_fallthru
      _
    %p199 = scmp.le.s32.totalorder 2, %s8
    // Predicated region
    $region33: #{_sparse_token_select.8} parent=5 // pred_check
      %p200 = pneg %p199
    $region34: #{_sparse_token_select.8} parent=5 // pred_check_branch
      %202 = sbr.rel (%p200) target = $region36
    $region35: #{_sparse_token_select.8} parent=5 // pred_region
      %s203 = ssub.s32 %s8, 2
      // Predicated region
      $region37: #{_sparse_token_select.8} parent=35 // pred_check
        %p204 = pneg %p89
      $region38: #{_sparse_token_select.8} parent=35 // pred_check_branch
        %206 = sbr.rel (%p204) target = $region40
      $region39: #{_sparse_token_select.8} parent=35 // pred_region
        %p207 = scmp.lt.s32.totalorder %s14, 1
        %s208 = scalar_select %p207, %s14, 1
        %s209 = scalar_lea.vmem %s2, %s208
      $region40: #{_sparse_token_select.8} parent=35 // pred_fallthru
        _
    $region36: #{_sparse_token_select.8} parent=5 // pred_fallthru
      _
  $region6: #{_sparse_token_select.8} parent=0 // loop_footer
    %s12 = sadd.s32 1, %s8
  $region7: #{_sparse_token_select.8} parent=0 // loop_footer_branch
    %7 = sbr.rel target = $region3
  $region8: #{_sparse_token_select.8} parent=0 // loop_exit
    _

// kernel: _sparse_token_select.11
$region0: #{_sparse_token_select.11}
  #allocation0 [shape = 'u32[]', space=smem, size = 0x4, offset = 0x4, fixed_abs, tag = 'smem constant byte address 0x4 - core index']
  #allocation1 [shape = 'u32[72,128]{1,0:T(1,128)}', space=vmem, size = 0x9000, scoped, tag = 'internal scratch']
  %s0 = inlined_call_operand.vmem [shape: f32[2,12,32], index: 0, kind: input, shape index: {}, may-alias: {0,4}]
  %s1 = inlined_call_operand.vmem [shape: bf16[2,12,32], index: 1, kind: input, shape index: {}]
  %s2 = inlined_call_operand.vmem [shape: f32[2,4,32], index: 2, kind: input, shape index: {}]
  %s3 = inlined_call_operand.vmem [shape: bf16[2,4,32], index: 3, kind: input, shape index: {}]
  %s4 = inlined_call_operand.vmem [shape: f32[2,12,32], index: 4, kind: output, shape index: {}, may-alias: {0,4}]
  %s5 = sld [smem:[#allocation0]]
  $region49: #{_sparse_token_select.11} parent=0
    _
  %s7 = ssub.s32 1, %s5
  %s8 = scalar_select 0, %s7, %s5
  loop: start=0, step=1, limit=4
  $region2: #{_sparse_token_select.11} parent=0 // loop_pre_header
    _
  $region3: #{_sparse_token_select.11} parent=0 // loop_header
    %s10 = sphi 0, %s14
    %p11 = scmp.ge.s32.totalorder %s10, 4
    %s20 = sphi 0, %s22
    %s23 = sphi 0, %s20
    %s24 = sphi 0, %s23
    %s40 = sphi 0, %s24
    %s46 = sphi 0, %s48
    %s49 = sphi 0, %s46
    %s50 = sphi 0, %s49
    %s66 = sphi 0, %s50
    %s72 = sphi 0, %s74
    %s75 = sphi 0, %s72
    %s76 = sphi 0, %s75
    %s92 = sphi 0, %s76
    %s98 = sphi 0, %s100
    %s101 = sphi 0, %s98
    %s102 = sphi 0, %s101
    %s118 = sphi 0, %s102
    %s124 = sphi 0, %s126
    %s127 = sphi 0, %s124
    %s128 = sphi 0, %s127
    %s144 = sphi 0, %s128
  $region4: #{_sparse_token_select.11} parent=0 // loop_header_branch
    %13 = sbr.rel (%p11) target = $region8
  $region5: #{_sparse_token_select.11} parent=0 // loop_body
    %s15 = ssub.s32 %s10, 1
    %s16 = ssub.s32 %s10, 2
    %s17 = sadd.s32 %s10, 1
    %s18 = ssub.s32 %s10, %s17
    %p19 = scmp.eq.s32.totalorder %s18, 0
    %s21 = sadd.s32 %s20, 1
    %s22 = scalar_select %p19, %s20, %s21
    %p25 = pneg %p19
    %p26 = scmp.eq.s32.totalorder %s10, 1
    %p27 = por %p25, %p26
    %p28 = scmp.ne.s32.totalorder %s20, %s23
    %p29 = scmp.eq.s32.totalorder %s10, 0
    %p30 = por %p28, %p29
    %p31 = scmp.ne.s32.totalorder %s20, %s23
    %p32 = scmp.eq.s32.totalorder %s15, 1
    %p33 = por %p31, %p32
    %p34 = scmp.ne.s32.totalorder %s23, %s24
    %p35 = scmp.eq.s32.totalorder %s15, 0
    %p36 = por %p34, %p35
    %p37 = scmp.ne.s32.totalorder %s23, %s24
    %p38 = scmp.eq.s32.totalorder %s16, 1
    %p39 = por %p37, %p38
    %p41 = scmp.ne.s32.totalorder %s24, %s40
    %p42 = scmp.eq.s32.totalorder %s16, 0
    %p43 = por %p41, %p42
    %s44 = ssub.s32 %s10, %s17
    %p45 = scmp.eq.s32.totalorder %s44, 0
    %s47 = sadd.s32 %s46, 1
    %s48 = scalar_select %p45, %s46, %s47
    %p51 = pneg %p45
    %p52 = scmp.eq.s32.totalorder %s10, 1
    %p53 = por %p51, %p52
    %p54 = scmp.ne.s32.totalorder %s46, %s49
    %p55 = scmp.eq.s32.totalorder %s10, 0
    %p56 = por %p54, %p55
    %p57 = scmp.ne.s32.totalorder %s46, %s49
    %p58 = scmp.eq.s32.totalorder %s15, 1
    %p59 = por %p57, %p58
    %p60 = scmp.ne.s32.totalorder %s49, %s50
    %p61 = scmp.eq.s32.totalorder %s15, 0
    %p62 = por %p60, %p61
    %p63 = scmp.ne.s32.totalorder %s49, %s50
    %p64 = scmp.eq.s32.totalorder %s16, 1
    %p65 = por %p63, %p64
    %p67 = scmp.ne.s32.totalorder %s50, %s66
    %p68 = scmp.eq.s32.totalorder %s16, 0
    %p69 = por %p67, %p68
    %s70 = ssub.s32 %s10, %s17
    %p71 = scmp.eq.s32.totalorder %s70, 0
    %s73 = sadd.s32 %s72, 1
    %s74 = scalar_select %p71, %s72, %s73
    %p77 = pneg %p71
    %p78 = scmp.eq.s32.totalorder %s10, 1
    %p79 = por %p77, %p78
    %p80 = scmp.ne.s32.totalorder %s72, %s75
    %p81 = scmp.eq.s32.totalorder %s10, 0
    %p82 = por %p80, %p81
    %p83 = scmp.ne.s32.totalorder %s72, %s75
    %p84 = scmp.eq.s32.totalorder %s15, 1
    %p85 = por %p83, %p84
    %p86 = scmp.ne.s32.totalorder %s75, %s76
    %p87 = scmp.eq.s32.totalorder %s15, 0
    %p88 = por %p86, %p87
    %p89 = scmp.ne.s32.totalorder %s75, %s76
    %p90 = scmp.eq.s32.totalorder %s16, 1
    %p91 = por %p89, %p90
    %p93 = scmp.ne.s32.totalorder %s76, %s92
    %p94 = scmp.eq.s32.totalorder %s16, 0
    %p95 = por %p93, %p94
    %s96 = ssub.s32 %s10, %s17
    %p97 = scmp.eq.s32.totalorder %s96, 0
    %s99 = sadd.s32 %s98, 1
    %s100 = scalar_select %p97, %s98, %s99
    %p103 = pneg %p97
    %p104 = scmp.eq.s32.totalorder %s10, 1
    %p105 = por %p103, %p104
    %p106 = scmp.ne.s32.totalorder %s98, %s101
    %p107 = scmp.eq.s32.totalorder %s10, 0
    %p108 = por %p106, %p107
    %p109 = scmp.ne.s32.totalorder %s98, %s101
    %p110 = scmp.eq.s32.totalorder %s15, 1
    %p111 = por %p109, %p110
    %p112 = scmp.ne.s32.totalorder %s101, %s102
    %p113 = scmp.eq.s32.totalorder %s15, 0
    %p114 = por %p112, %p113
    %p115 = scmp.ne.s32.totalorder %s101, %s102
    %p116 = scmp.eq.s32.totalorder %s16, 1
    %p117 = por %p115, %p116
    %p119 = scmp.ne.s32.totalorder %s102, %s118
    %p120 = scmp.eq.s32.totalorder %s16, 0
    %p121 = por %p119, %p120
    %s122 = ssub.s32 %s10, %s17
    %p123 = scmp.eq.s32.totalorder %s122, 0
    %s125 = sadd.s32 %s124, 1
    %s126 = scalar_select %p123, %s124, %s125
    %p129 = pneg %p123
    %p130 = scmp.eq.s32.totalorder %s10, 1
    %p131 = por %p129, %p130
    %p132 = scmp.ne.s32.totalorder %s124, %s127
    %p133 = scmp.eq.s32.totalorder %s10, 0
    %p134 = por %p132, %p133
    %p135 = scmp.ne.s32.totalorder %s124, %s127
    %p136 = scmp.eq.s32.totalorder %s15, 1
    %p137 = por %p135, %p136
    %p138 = scmp.ne.s32.totalorder %s127, %s128
    %p139 = scmp.eq.s32.totalorder %s15, 0
    %p140 = por %p138, %p139
    %p141 = scmp.ne.s32.totalorder %s127, %s128
    %p142 = scmp.eq.s32.totalorder %s16, 1
    %p143 = por %p141, %p142
    %p145 = scmp.ne.s32.totalorder %s128, %s144
    %p146 = scmp.eq.s32.totalorder %s16, 0
    %p147 = por %p145, %p146
    %p148 = scmp.le.s32.totalorder 1, %s10
    %p149 = scmp.lt.s32.totalorder %s10, 3
    %p150 = pnand %p148, %p149
    %p151 = pneg %p150
    // Predicated region
    $region9: #{_sparse_token_select.11} parent=5 // pred_check
      _
    $region10: #{_sparse_token_select.11} parent=5 // pred_check_branch
      %153 = sbr.rel (%p150) target = $region12
    $region11: #{_sparse_token_select.11} parent=5 // pred_region
      %s154 = ssub.s32 %s10, 1
    $region12: #{_sparse_token_select.11} parent=5 // pred_fallthru
      _
    %p155 = scmp.lt.s32.totalorder %s10, 2
    // Predicated region
    $region13: #{_sparse_token_select.11} parent=5 // pred_check
      %p156 = pneg %p155
    $region14: #{_sparse_token_select.11} parent=5 // pred_check_branch
      %158 = sbr.rel (%p156) target = $region16
    $region15: #{_sparse_token_select.11} parent=5 // pred_region
      // Predicated region
      $region17: #{_sparse_token_select.11} parent=15 // pred_check
        %p159 = pneg %p30
      $region18: #{_sparse_token_select.11} parent=15 // pred_check_branch
        %161 = sbr.rel (%p159) target = $region20
      $region19: #{_sparse_token_select.11} parent=15 // pred_region
        %p162 = scmp.lt.s32.totalorder %s10, 1
        %s163 = scalar_select %p162, %s10, 1
        %s164 = smul.addr %s163, 2
        %s165 = smul.addr %s164, 8
        %s166 = scalar_lea.vmem %s0, %s165
      $region20: #{_sparse_token_select.11} parent=15 // pred_fallthru
        _
      // Predicated region
      $region21: #{_sparse_token_select.11} parent=15 // pred_check
        %p167 = pneg %p56
      $region22: #{_sparse_token_select.11} parent=15 // pred_check_branch
        %169 = sbr.rel (%p167) target = $region24
      $region23: #{_sparse_token_select.11} parent=15 // pred_region
        %p170 = scmp.lt.s32.totalorder %s10, 1
        %s171 = scalar_select %p170, %s10, 1
        %s172 = smul.addr %s171, 2
        %s173 = smul.addr %s172, 4
        %s174 = scalar_lea.vmem %s1, %s173
      $region24: #{_sparse_token_select.11} parent=15 // pred_fallthru
        _
      // Predicated region
      $region25: #{_sparse_token_select.11} parent=15 // pred_check
        %p175 = pneg %p82
      $region26: #{_sparse_token_select.11} parent=15 // pred_check_branch
        %177 = sbr.rel (%p175) target = $region28
      $region27: #{_sparse_token_select.11} parent=15 // pred_region
        %p178 = scmp.lt.s32.totalorder %s10, 1
        %s179 = scalar_select %p178, %s10, 1
        %s180 = smul.addr %s179, 4
        %s181 = scalar_lea.vmem %s2, %s180
      $region28: #{_sparse_token_select.11} parent=15 // pred_fallthru
        _
      // Predicated region
      $region29: #{_sparse_token_select.11} parent=15 // pred_check
        %p182 = pneg %p108
      $region30: #{_sparse_token_select.11} parent=15 // pred_check_branch
        %184 = sbr.rel (%p182) target = $region32
      $region31: #{_sparse_token_select.11} parent=15 // pred_region
        %p185 = scmp.lt.s32.totalorder %s10, 1
        %s186 = scalar_select %p185, %s10, 1
        %s187 = smul.addr %s186, 2
        %s188 = scalar_lea.vmem %s3, %s187
      $region32: #{_sparse_token_select.11} parent=15 // pred_fallthru
        _
    $region16: #{_sparse_token_select.11} parent=5 // pred_fallthru
      _
    %p189 = scmp.le.s32.totalorder 1, %s10
    %p190 = scmp.lt.s32.totalorder %s10, 3
    %p191 = pnand %p189, %p190
    %p192 = pneg %p191
    // Predicated region
    $region33: #{_sparse_token_select.11} parent=5 // pred_check
      _
    $region34: #{_sparse_token_select.11} parent=5 // pred_check_branch
      %194 = sbr.rel (%p191) target = $region36
    $region35: #{_sparse_token_select.11} parent=5 // pred_region
      %s195 = ssub.s32 %s10, 1
      %p196 = scmp.lt.s32.totalorder %s15, 1
      %s197 = scalar_select %p196, %s15, 1
      %s198 = smul.addr %s197, 2
      %s199 = smul.addr %s198, 8
      %s200 = scalar_lea.vmem %s0, %s199
      %p201 = pneg %p36
      %p202 = pneg %p33
      %p203 = scmp.lt.s32.totalorder %s15, 1
      %s204 = scalar_select %p203, %s15, 1
      %s205 = smul.addr %s204, 2
      %s206 = smul.addr %s205, 4
      %s207 = scalar_lea.vmem %s1, %s206
      %p208 = pneg %p62
      %p209 = pneg %p59
      %p210 = scmp.lt.s32.totalorder %s15, 1
      %s211 = scalar_select %p210, %s15, 1
      %s212 = smul.addr %s211, 4
      %s213 = scalar_lea.vmem %s2, %s212
      %p214 = pneg %p88
      %p215 = pneg %p85
      %p216 = scmp.lt.s32.totalorder %s15, 1
      %s217 = scalar_select %p216, %s15, 1
      %s218 = smul.addr %s217, 2
      %s219 = scalar_lea.vmem %s3, %s218
      %p220 = pneg %p114
      %p221 = pneg %p111
      %p222 = pneg %p140
      %p223 = pneg %p137
      %p224 = scmp.lt.s32.totalorder %s15, 1
      %s225 = scalar_select %p224, %s15, 1
      %s226 = smul.addr %s225, 2
      %s227 = smul.addr %s226, 8
      %s228 = scalar_lea.vmem %s4, %s227
      %p229 = scmp.lt.s32.totalorder %s15, 1
      %s230 = scalar_select %p229, %s15, 1
      %s231 = smul.addr %s230, 2
      %s232 = smul.addr %s231, 8
      %s233 = scalar_lea.vmem %s0, %s232
      %p234 = scmp.lt.s32.totalorder %s15, 1
      %s235 = scalar_select %p234, %s15, 1
      %s236 = smul.addr %s235, 2
      %s237 = smul.addr %s236, 4
      %s238 = scalar_lea.vmem %s1, %s237
      %p239 = scmp.lt.s32.totalorder %s15, 1
      %s240 = scalar_select %p239, %s15, 1
      %s241 = smul.addr %s240, 4
      %s242 = scalar_lea.vmem %s2, %s241
      %p243 = scmp.lt.s32.totalorder %s15, 1
      %s244 = scalar_select %p243, %s15, 1
      %s245 = smul.addr %s244, 2
      %s246 = scalar_lea.vmem %s3, %s245
      %p247 = scmp.lt.s32.totalorder %s15, 1
      %s248 = scalar_select %p247, %s15, 1
      %s249 = smul.addr %s248, 2
      %s250 = smul.addr %s249, 8
      %s251 = scalar_lea.vmem %s4, %s250
      %v253 = vld [vmem:[%s238] sm:$0xf]
      %v254 = vld [vmem:[%s238 + $0x4] sm:$0x3]
      %v255 = vld [vmem:[%s246] sm:$0x3]
      %v258 = vunpack.c.l.b16 %v253
      %v259 = vunpack.c.l.b16 %v254
      %v260 = vpack.c.b16 %v259, %v258
      %vm261 = vcmask 261120
      %v263 = vsel %vm261, %v255, 0
      %v266 = vsel %vm261, %v260, 0
      %268 = vmatpush.bf16.xpose.msra.mxu0 0
      %269 = vmatpush.bf16.xpose.msra.mxu0 0
      %270 = vmatpush.bf16.xpose.msra.mxu0 0
      %271 = vmatpush.bf16.xpose.msra.mxu0 0
      %272 = vmatpush.bf16.xpose.msra.mxu0 0
      %273 = vmatpush.bf16.xpose.msra.mxu0 0
      %274 = vmatpush.bf16.xpose.msra.mxu0 0
      %275 = vmatpush.bf16.xpose.msra.mxu0 %v266
      %276 = vmatmul.bf16.gmra.mxu0 %v263
      %v277 = vpop.f32.mrf.mxu0
      %v278 = vadd.f32 0.0, %v277
      %v279 = vpop.f32.mrf.mxu0
      %280 = vdwg.mxu0
      %vm281 = vcmask 93184
      %v282 = vsel %vm281, %v278, -inf
      %283 = vmax.xlane.f32.xlu0 %v282
      %v284 = vpop.xlane.xlu0 %283
      %v285 = vlaneseq
      %v286 = vand.u32 %v285, 127
      %vm287 = vcmp.eq.f32.partialorder %v278, %v284
      %v288 = vsel %vm287, %v286, 12
      %v289 = vsel %vm281, %v288, 2147483647
      %v290 = vand.u32 %v289, 65535
      %v291 = vshra.s32 %v289, 16
      %v292 = vcvt.s32.f32 %v290
      %v293 = vcvt.s32.f32 %v291
      %294 = vmin.xlane.f32.xlu0 %v293
      %v295 = vpop.xlane.xlu0 %294
      %vm296 = vcmp.eq.f32.partialorder %v293, %v295
      %v297 = vsel %vm296, %v292, inf
      %298 = vmin.xlane.f32.xlu0 %v297
      %v299 = vpop.xlane.xlu0 %298
      %v300 = vcvt.f32.s32 %v299
      %v301 = vcvt.f32.s32 %v295
      %v302 = vshll.u32 %v301, 16
      %v303 = vadd.s32 %v302, %v300
      %vm304 = vcmp.eq.s32.totalorder %v286, %v303
      %v305 = vsel %vm304, 1, 0
      %v306 = vcvt.s32.f32 %v305
      %v307 = vpack.c.bf16 %v306, %v306
      %v308 = vld [vmem:[%s242] sm:$0xf]
      %v309 = vpack.c.bf16 %v308, %v308
      %v310 = vunpack.c.l.bf16 %v309
      %v311 = vsub.f32 %v308, %v310
      %v312 = vpack.c.bf16 %v311, %v311
      %313 = vxpose.xlu0.c.b16.start [1/8] %v307, 128
      %314 = vxpose.xlu0.c.b16.cont [2/8] 0, 128
      %315 = vxpose.xlu0.c.b16.cont [3/8] 0, 128
      %316 = vxpose.xlu0.c.b16.cont [4/8] 0, 128
      %317 = vxpose.xlu0.c.b16.cont [5/8] 0, 128
      %318 = vxpose.xlu0.c.b16.cont [6/8] 0, 128
      %319 = vxpose.xlu0.c.b16.cont [7/8] 0, 128
      %320 = vxpose.xlu0.c.b16.end [8/8] 0, 128
      %v321 = vpop.trf.xlu0
      %v322 = vpop.trf.xlu0
      %v323 = vpop.trf.xlu0
      %v324 = vpop.trf.xlu0
      %v325 = vpop.trf.xlu0
      %v326 = vpop.trf.xlu0
      %v327 = vpop.trf.xlu0
      %v328 = vpop.trf.xlu0
      %vm329 = vcmask 31744
      %v331 = vsel %vm329, %v321, 0
      %vm333 = vcmask 1041408
      %v335 = vsel %vm333, %v312, 0
      %337 = vmatpush.bf16.msra.mxu0 0
      %338 = vmatpush.bf16.msra.mxu0 0
      %339 = vmatpush.bf16.msra.mxu0 0
      %340 = vmatpush.bf16.msra.mxu0 0
      %341 = vmatpush.bf16.msra.mxu0 0
      %342 = vmatpush.bf16.msra.mxu0 0
      %343 = vmatpush.bf16.msra.mxu0 0
      %344 = vmatpush.bf16.msra.mxu0 %v335
      %345 = vmatmul.bf16.gmra.mxu0 %v331
      %v346 = vpop.f32.mrf.mxu0
      %v347 = vadd.f32 0.0, %v346
      %v348 = vpop.f32.mrf.mxu0
      %v349 = vadd.f32 0.0, %v348
      %350 = vdwg.mxu0
      %v352 = vsel %vm333, %v309, 0
      %354 = vmatpush.bf16.msra.mxu0 0
      %355 = vmatpush.bf16.msra.mxu0 0
      %356 = vmatpush.bf16.msra.mxu0 0
      %357 = vmatpush.bf16.msra.mxu0 0
      %358 = vmatpush.bf16.msra.mxu0 0
      %359 = vmatpush.bf16.msra.mxu0 0
      %360 = vmatpush.bf16.msra.mxu0 0
      %361 = vmatpush.bf16.msra.mxu0 %v352
      %362 = vmatmul.bf16.gmra.mxu0 %v331
      %v363 = vpop.f32.mrf.mxu0
      %v364 = vadd.f32 %v347, %v363
      %v365 = vpop.f32.mrf.mxu0
      %v366 = vadd.f32 %v349, %v365
      %367 = vdwg.mxu0
      %v368 = vld [vmem:[%s233] sm:$0xff]
      %v369 = vld [vmem:[%s233 + $0x8] sm:$0xf]
      %v370 = vadd.f32 %v368, %v364
      %v371 = vadd.f32 %v369, %v366
      %v372 = vunpack.c.l.bf16 %v307
      %v373 = vsel %vm281, %v372, 0.0
      %v374 = vrot.slane %v373, 4
      %v375 = vadd.f32 %v373, %v374
      %v376 = vrot.slane %v375, 2
      %v377 = vadd.f32 %v375, %v376
      %v378 = vrot.slane %v377, 1
      %v379 = vadd.f32 %v377, %v378
      %v380 = vadd.f32 %v379, 1.0
      %v381 = vrcp.pop %v380
      %v382 = vmul.f32 %v380, %v381
      %v383 = vsub.f32 1.0, %v382
      %v384 = vmul.f32 %v381, %v383
      %v385 = vadd.f32 %v381, %v384
      %vm386 = vweird.f32 %v380
      %vm387 = vweird.f32 %v381
      %vm388 = vmor %vm386, %vm387
      %v389 = vsel %vm388, %v381, %v385
      %v390 = vand.u32 2147483647, %v380
      %vm391 = vcmp.eq.f32.partialorder %v390, 8.507059e+37
      %v392 = vand.u32 %v380, 2147483648
      %v393 = vor.u32 1.1754944e-38, %v392
      %v394 = vsel %vm391, %v393, %v389
      %v395 = vmul.f32 1.0, %v394
      %v396 = vlaneseq
      %v397 = vshrl.u32 %v396, 7
      %399 = vset.pattern.permute.xlu0 %v397
      %400 = vperm.xlu0 %399, %v395
      %v401 = vpop.permute.xlu0 %400
      %v402 = vlaneseq
      %v403 = vshrl.u32 %v402, 7
      %v404 = vadd.s32 %v403, 8
      %405 = vset.pattern.permute.xlu0 %v404
      %406 = vperm.xlu0 %405, %v395
      %v407 = vpop.permute.xlu0 %406
      %v408 = vmul.f32 %v370, %v401
      %v409 = vmul.f32 %v371, %v407
      %410 = vst.msk [vmem:[%s251] sm:$0xff] %vm261, %v408
      %vm411 = vcmask 257024
      %412 = vst.msk [vmem:[%s251 + $0x8] sm:$0xf] %vm411, %v409
      %p413 = scmp.lt.s32.totalorder %s15, 1
      %s414 = scalar_select %p413, %s15, 1
      %s415 = smul.addr %s414, 2
      %s416 = smul.addr %s415, 8
      %s417 = scalar_lea.vmem %s4, %s416
      // Predicated region
      $region37: #{_sparse_token_select.11} parent=35 // pred_check
        %p418 = pneg %p137
      $region38: #{_sparse_token_select.11} parent=35 // pred_check_branch
        %420 = sbr.rel (%p418) target = $region40
      $region39: #{_sparse_token_select.11} parent=35 // pred_region
        _
      $region40: #{_sparse_token_select.11} parent=35 // pred_fallthru
        _
    $region36: #{_sparse_token_select.11} parent=5 // pred_fallthru
      _
    %p421 = scmp.le.s32.totalorder 2, %s10
    // Predicated region
    $region41: #{_sparse_token_select.11} parent=5 // pred_check
      %p422 = pneg %p421
    $region42: #{_sparse_token_select.11} parent=5 // pred_check_branch
      %424 = sbr.rel (%p422) target = $region44
    $region43: #{_sparse_token_select.11} parent=5 // pred_region
      %s425 = ssub.s32 %s10, 2
      // Predicated region
      $region45: #{_sparse_token_select.11} parent=43 // pred_check
        %p426 = pneg %p143
      $region46: #{_sparse_token_select.11} parent=43 // pred_check_branch
        %428 = sbr.rel (%p426) target = $region48
      $region47: #{_sparse_token_select.11} parent=43 // pred_region
        %p429 = scmp.lt.s32.totalorder %s16, 1
        %s430 = scalar_select %p429, %s16, 1
        %s431 = smul.addr %s430, 2
        %s432 = smul.addr %s431, 8
        %s433 = scalar_lea.vmem %s4, %s432
      $region48: #{_sparse_token_select.11} parent=43 // pred_fallthru
        _
    $region44: #{_sparse_token_select.11} parent=5 // pred_fallthru
      _
  $region6: #{_sparse_token_select.11} parent=0 // loop_footer
    %s14 = sadd.s32 1, %s10
  $region7: #{_sparse_token_select.11} parent=0 // loop_footer_branch
    %9 = sbr.rel target = $region3
  $region8: #{_sparse_token_select.11} parent=0 // loop_exit
    _

</llo_original>
